<compile_context>
chip_gen: v6e
topology: v6e:2x2x1
jax: 0.10.0
libtpu: 0.0.40
codegen_flags: <defaults>
</compile_context>

<pallas_src>
import jax
import jax.numpy as jnp
from jax.experimental import pallas as pl
from jax.experimental.pallas import tpu as pltpu


# ---------------------------------------------------------------------------
# Packed-parameter table (1-D f32, length 256, stored in SMEM).
#   [  0: 20]  W1 (10, 2)  row-major (torch (out, in) convention)
#   [ 20: 30]  b1 (10,)
#   [ 30:130]  W2 (10, 10) row-major
#   [130:140]  b2 (10,)
#   [140:170]  W3 (3, 10)  row-major
#   [170:173]  b3 (3,)
_W1, _B1 = 0, 20
_W2, _B2 = 30, 130
_W3, _B3 = 140, 170
_PTOT = 256          # pads to exactly 1 KiB of SMEM

_SUB = 8             # sub-chunk rows processed per inner-loop step (1 vreg/plane)


def _mlp_kernel(p_ref, x_ref, o_ref):
    # p_ref: (256,) f32 in SMEM -- packed weights/biases (whole-array, no blocking).
    # x_ref: (2, TB, 128) f32 feature planes (batch on sublanes x lanes).
    # o_ref: (3, TB, 128) f32 output feature planes.
    tb = x_ref.shape[1]

    # Read the 143 parameters once per grid step (cheap SMEM scalar loads);
    # they become sreg-resident, loop-invariant scalar operands below.
    w1 = [[p_ref[_W1 + j * 2 + k] for k in range(2)] for j in range(10)]
    b1 = [p_ref[_B1 + j] for j in range(10)]
    w2 = [[p_ref[_W2 + j * 10 + k] for k in range(10)] for j in range(10)]
    b2 = [p_ref[_B2 + j] for j in range(10)]
    w3 = [[p_ref[_W3 + j * 10 + k] for k in range(10)] for j in range(3)]
    b3 = [p_ref[_B3 + j] for j in range(3)]

    def do_chunk(base, size):
        # Pure VPU work on (size, 128) planes; scalar weights splat for free.
        x0 = x_ref[0, pl.ds(base, size), :]
        x1 = x_ref[1, pl.ds(base, size), :]

        # Layer 1: h1_j = relu(w1[j,0]*x0 + w1[j,1]*x1 + b1[j])
        h1 = [jnp.maximum(x0 * w1[j][0] + x1 * w1[j][1] + b1[j], 0.0)
              for j in range(10)]

        # Layer 2: h2_j = relu(sum_k w2[j,k]*h1_k + b2[j])
        h2 = []
        for j in range(10):
            acc = h1[0] * w2[j][0]
            for k in range(1, 10):
                acc = acc + h1[k] * w2[j][k]
            h2.append(jnp.maximum(acc + b2[j], 0.0))

        # Layer 3: out_j = sum_k w3[j,k]*h2_k + b3[j]   (no activation)
        for j in range(3):
            acc = h2[0] * w3[j][0]
            for k in range(1, 10):
                acc = acc + h2[k] * w3[j][k]
            o_ref[j, pl.ds(base, size), :] = acc + b3[j]

    n_full = tb // _SUB
    if n_full:
        def body(i, carry):
            do_chunk(pl.multiple_of(i * _SUB, _SUB), _SUB)
            return carry
        jax.lax.fori_loop(0, n_full, body, 0, unroll=True)
    if tb % _SUB:                        # static tail (only for tiny batches)
        do_chunk(n_full * _SUB, tb % _SUB)


# ---------------------------------------------------------------------------
# Wrappers
# ---------------------------------------------------------------------------
def _next_pow2(v: int) -> int:
    return 1 if v <= 1 else 1 << (v - 1).bit_length()


def _choose_tile(nb: int) -> int:
    """Lane-group tile size. <=64 groups -> single tile; otherwise 8K-16K-sample
    tiles so the grid has >=2 'parallel' steps (both v7x TensorCores busy)."""
    if nb <= 64:
        return nb                         # full extent satisfies the (8,128) rule
    for tb in (128, 64, 32, 16, 8):       # 16384 .. 1024 samples per tile
        if nb % tb == 0:
            return tb
    return nb                             # non-bucketed caller: fall back to 1 tile


@jax.jit
def spiral_forward_planes(x_planes, packed_params):
    """Transpose-free fast path.

    x_planes: (2, NB, 128) f32 feature planes; packed_params: (256,) f32 from
    pack_params.  Returns (3, NB, 128) f32 feature planes.
    """
    nb = x_planes.shape[1]
    tb = _choose_tile(nb)
    grid = (nb // tb,)
    return pl.pallas_call(
        _mlp_kernel,
        out_shape=jax.ShapeDtypeStruct((3, nb, 128), jnp.float32),
        grid=grid,
        in_specs=[
            pl.BlockSpec(memory_space=pltpu.MemorySpace.SMEM),     # param table
            pl.BlockSpec((2, tb, 128), lambda i: (0, i, 0)),       # x planes
        ],
        out_specs=pl.BlockSpec((3, tb, 128), lambda i: (0, i, 0)),
        compiler_params=pltpu.CompilerParams(
            dimension_semantics=("parallel",)),   # shard batch tiles across TCs
    )(packed_params, x_planes)


def spiral_triple_layer(x, packed_params):
    """PyTorch-compatible entry: x (N, 2) f32 -> (N, 3) f32.

    The transpose/pad here is layout plumbing only; latency-critical callers
    should keep data in feature-plane layout and call spiral_forward_planes.
    """
    n = x.shape[0]
    nb = _next_pow2(max(1, (n + 127) // 128))     # bucket -> stable compiled shapes
    n_pad = nb * 128
    x_t = jnp.zeros((2, n_pad), jnp.float32).at[:, :n].set(
        jnp.asarray(x, jnp.float32).T)
    out_planes = spiral_forward_planes(x_t.reshape(2, nb, 128), packed_params)
    return out_planes.reshape(3, n_pad)[:, :n].T


def pack_params(params):
    """Pack all weights/biases (PyTorch (out,in) convention) into one (256,) table."""
    flat = jnp.concatenate([
        jnp.asarray(params["w1"], jnp.float32).reshape(-1),
        jnp.asarray(params["b1"], jnp.float32).reshape(-1),
        jnp.asarray(params["w2"], jnp.float32).reshape(-1),
        jnp.asarray(params["b2"], jnp.float32).reshape(-1),
        jnp.asarray(params["w3"], jnp.float32).reshape(-1),
        jnp.asarray(params["b3"], jnp.float32).reshape(-1),
    ])
    return jnp.zeros((_PTOT,), jnp.float32).at[:flat.shape[0]].set(flat)


def init_params(key):
    """Deterministic init mimicking nn.Linear default (uniform +/- 1/sqrt(fan_in)).
    Weights kept in PyTorch convention: (out_features, in_features)."""
    k1, k2, k3, k4, k5, k6 = jax.random.split(key, 6)

    def uni(k, shape, fan_in):
        bound = 1.0 / jnp.sqrt(float(fan_in))
        return jax.random.uniform(k, shape, jnp.float32, -bound, bound)

    return {
        "w1": uni(k1, (10, 2), 2),   "b1": uni(k2, (10,), 2),
        "w2": uni(k3, (10, 10), 10), "b2": uni(k4, (10,), 10),
        "w3": uni(k5, (3, 10), 10),  "b3": uni(k6, (3,), 10),
    }


def _reference(x, p):
    h1 = jnp.maximum(x @ p["w1"].T + p["b1"], 0.0)
    h2 = jnp.maximum(h1 @ p["w2"].T + p["b2"], 0.0)
    return h2 @ p["w3"].T + p["b3"]


if __name__ == "__main__":
    key = jax.random.PRNGKey(0)
    k_params, k_x1, k_x2 = jax.random.split(key, 3)

    params = init_params(k_params)
    packed = pack_params(params)

    # Small spiral-dataset style batch: 8 points in R^2 (single-tile path).
    x_small = jax.random.normal(k_x1, (8, 2), dtype=jnp.float32)
    out_small = jax.block_until_ready(spiral_triple_layer(x_small, packed))
    assert out_small.shape == (8, 3)
    assert jnp.allclose(out_small, _reference(x_small, params), atol=1e-4, rtol=1e-4)

    # Medium batch exercising the multi-tile "parallel" grid path (grid=(2,)).
    x_big = jax.random.normal(k_x2, (9000, 2), dtype=jnp.float32)
    out_big = jax.block_until_ready(spiral_triple_layer(x_big, packed))
    assert out_big.shape == (9000, 3)
    assert jnp.allclose(out_big, _reference(x_big, params), atol=1e-4, rtol=1e-4)

    print("KERNEL_OK")
</pallas_src>

<mosaic_0001>
module attributes {stable_mosaic.version = 11 : i64} {
  func.func @_mlp_kernel(%arg0: i32, %arg1: memref<256xf32, #tpu.memory_space<smem>>, %arg2: memref<2x1x128xf32, #tpu.memory_space<vmem>>, %arg3: memref<3x1x128xf32, #tpu.memory_space<vmem>>) attributes {dimension_semantics = [#tpu.dimension_semantics<parallel>], iteration_bounds = array<i64: 1>, scalar_prefetch = 0 : i64, scratch_operands = 0 : i64, tpu.core_type = #tpu.core_type<tc>, window_params = [{transform_indices = @transform_0, window_bounds = array<i64: 256>}, {transform_indices = @transform_1, window_bounds = array<i64: 2, 1, 128>}, {transform_indices = @transform_2, window_bounds = array<i64: 3, 1, 128>}]} {
    %c0 = arith.constant 0 : index
    %0 = memref.load %arg1[%c0] : memref<256xf32, #tpu.memory_space<smem>>
    %c1 = arith.constant 1 : index
    %1 = memref.load %arg1[%c1] : memref<256xf32, #tpu.memory_space<smem>>
    %c2 = arith.constant 2 : index
    %2 = memref.load %arg1[%c2] : memref<256xf32, #tpu.memory_space<smem>>
    %c3 = arith.constant 3 : index
    %3 = memref.load %arg1[%c3] : memref<256xf32, #tpu.memory_space<smem>>
    %c4 = arith.constant 4 : index
    %4 = memref.load %arg1[%c4] : memref<256xf32, #tpu.memory_space<smem>>
    %c5 = arith.constant 5 : index
    %5 = memref.load %arg1[%c5] : memref<256xf32, #tpu.memory_space<smem>>
    %c6 = arith.constant 6 : index
    %6 = memref.load %arg1[%c6] : memref<256xf32, #tpu.memory_space<smem>>
    %c7 = arith.constant 7 : index
    %7 = memref.load %arg1[%c7] : memref<256xf32, #tpu.memory_space<smem>>
    %c8 = arith.constant 8 : index
    %8 = memref.load %arg1[%c8] : memref<256xf32, #tpu.memory_space<smem>>
    %c9 = arith.constant 9 : index
    %9 = memref.load %arg1[%c9] : memref<256xf32, #tpu.memory_space<smem>>
    %c10 = arith.constant 10 : index
    %10 = memref.load %arg1[%c10] : memref<256xf32, #tpu.memory_space<smem>>
    %c11 = arith.constant 11 : index
    %11 = memref.load %arg1[%c11] : memref<256xf32, #tpu.memory_space<smem>>
    %c12 = arith.constant 12 : index
    %12 = memref.load %arg1[%c12] : memref<256xf32, #tpu.memory_space<smem>>
    %c13 = arith.constant 13 : index
    %13 = memref.load %arg1[%c13] : memref<256xf32, #tpu.memory_space<smem>>
    %c14 = arith.constant 14 : index
    %14 = memref.load %arg1[%c14] : memref<256xf32, #tpu.memory_space<smem>>
    %c15 = arith.constant 15 : index
    %15 = memref.load %arg1[%c15] : memref<256xf32, #tpu.memory_space<smem>>
    %c16 = arith.constant 16 : index
    %16 = memref.load %arg1[%c16] : memref<256xf32, #tpu.memory_space<smem>>
    %c17 = arith.constant 17 : index
    %17 = memref.load %arg1[%c17] : memref<256xf32, #tpu.memory_space<smem>>
    %c18 = arith.constant 18 : index
    %18 = memref.load %arg1[%c18] : memref<256xf32, #tpu.memory_space<smem>>
    %c19 = arith.constant 19 : index
    %19 = memref.load %arg1[%c19] : memref<256xf32, #tpu.memory_space<smem>>
    %c20 = arith.constant 20 : index
    %20 = memref.load %arg1[%c20] : memref<256xf32, #tpu.memory_space<smem>>
    %c21 = arith.constant 21 : index
    %21 = memref.load %arg1[%c21] : memref<256xf32, #tpu.memory_space<smem>>
    %c22 = arith.constant 22 : index
    %22 = memref.load %arg1[%c22] : memref<256xf32, #tpu.memory_space<smem>>
    %c23 = arith.constant 23 : index
    %23 = memref.load %arg1[%c23] : memref<256xf32, #tpu.memory_space<smem>>
    %c24 = arith.constant 24 : index
    %24 = memref.load %arg1[%c24] : memref<256xf32, #tpu.memory_space<smem>>
    %c25 = arith.constant 25 : index
    %25 = memref.load %arg1[%c25] : memref<256xf32, #tpu.memory_space<smem>>
    %c26 = arith.constant 26 : index
    %26 = memref.load %arg1[%c26] : memref<256xf32, #tpu.memory_space<smem>>
    %c27 = arith.constant 27 : index
    %27 = memref.load %arg1[%c27] : memref<256xf32, #tpu.memory_space<smem>>
    %c28 = arith.constant 28 : index
    %28 = memref.load %arg1[%c28] : memref<256xf32, #tpu.memory_space<smem>>
    %c29 = arith.constant 29 : index
    %29 = memref.load %arg1[%c29] : memref<256xf32, #tpu.memory_space<smem>>
    %c30 = arith.constant 30 : index
    %30 = memref.load %arg1[%c30] : memref<256xf32, #tpu.memory_space<smem>>
    %c31 = arith.constant 31 : index
    %31 = memref.load %arg1[%c31] : memref<256xf32, #tpu.memory_space<smem>>
    %c32 = arith.constant 32 : index
    %32 = memref.load %arg1[%c32] : memref<256xf32, #tpu.memory_space<smem>>
    %c33 = arith.constant 33 : index
    %33 = memref.load %arg1[%c33] : memref<256xf32, #tpu.memory_space<smem>>
    %c34 = arith.constant 34 : index
    %34 = memref.load %arg1[%c34] : memref<256xf32, #tpu.memory_space<smem>>
    %c35 = arith.constant 35 : index
    %35 = memref.load %arg1[%c35] : memref<256xf32, #tpu.memory_space<smem>>
    %c36 = arith.constant 36 : index
    %36 = memref.load %arg1[%c36] : memref<256xf32, #tpu.memory_space<smem>>
    %c37 = arith.constant 37 : index
    %37 = memref.load %arg1[%c37] : memref<256xf32, #tpu.memory_space<smem>>
    %c38 = arith.constant 38 : index
    %38 = memref.load %arg1[%c38] : memref<256xf32, #tpu.memory_space<smem>>
    %c39 = arith.constant 39 : index
    %39 = memref.load %arg1[%c39] : memref<256xf32, #tpu.memory_space<smem>>
    %c40 = arith.constant 40 : index
    %40 = memref.load %arg1[%c40] : memref<256xf32, #tpu.memory_space<smem>>
    %c41 = arith.constant 41 : index
    %41 = memref.load %arg1[%c41] : memref<256xf32, #tpu.memory_space<smem>>
    %c42 = arith.constant 42 : index
    %42 = memref.load %arg1[%c42] : memref<256xf32, #tpu.memory_space<smem>>
    %c43 = arith.constant 43 : index
    %43 = memref.load %arg1[%c43] : memref<256xf32, #tpu.memory_space<smem>>
    %c44 = arith.constant 44 : index
    %44 = memref.load %arg1[%c44] : memref<256xf32, #tpu.memory_space<smem>>
    %c45 = arith.constant 45 : index
    %45 = memref.load %arg1[%c45] : memref<256xf32, #tpu.memory_space<smem>>
    %c46 = arith.constant 46 : index
    %46 = memref.load %arg1[%c46] : memref<256xf32, #tpu.memory_space<smem>>
    %c47 = arith.constant 47 : index
    %47 = memref.load %arg1[%c47] : memref<256xf32, #tpu.memory_space<smem>>
    %c48 = arith.constant 48 : index
    %48 = memref.load %arg1[%c48] : memref<256xf32, #tpu.memory_space<smem>>
    %c49 = arith.constant 49 : index
    %49 = memref.load %arg1[%c49] : memref<256xf32, #tpu.memory_space<smem>>
    %c50 = arith.constant 50 : index
    %50 = memref.load %arg1[%c50] : memref<256xf32, #tpu.memory_space<smem>>
    %c51 = arith.constant 51 : index
    %51 = memref.load %arg1[%c51] : memref<256xf32, #tpu.memory_space<smem>>
    %c52 = arith.constant 52 : index
    %52 = memref.load %arg1[%c52] : memref<256xf32, #tpu.memory_space<smem>>
    %c53 = arith.constant 53 : index
    %53 = memref.load %arg1[%c53] : memref<256xf32, #tpu.memory_space<smem>>
    %c54 = arith.constant 54 : index
    %54 = memref.load %arg1[%c54] : memref<256xf32, #tpu.memory_space<smem>>
    %c55 = arith.constant 55 : index
    %55 = memref.load %arg1[%c55] : memref<256xf32, #tpu.memory_space<smem>>
    %c56 = arith.constant 56 : index
    %56 = memref.load %arg1[%c56] : memref<256xf32, #tpu.memory_space<smem>>
    %c57 = arith.constant 57 : index
    %57 = memref.load %arg1[%c57] : memref<256xf32, #tpu.memory_space<smem>>
    %c58 = arith.constant 58 : index
    %58 = memref.load %arg1[%c58] : memref<256xf32, #tpu.memory_space<smem>>
    %c59 = arith.constant 59 : index
    %59 = memref.load %arg1[%c59] : memref<256xf32, #tpu.memory_space<smem>>
    %c60 = arith.constant 60 : index
    %60 = memref.load %arg1[%c60] : memref<256xf32, #tpu.memory_space<smem>>
    %c61 = arith.constant 61 : index
    %61 = memref.load %arg1[%c61] : memref<256xf32, #tpu.memory_space<smem>>
    %c62 = arith.constant 62 : index
    %62 = memref.load %arg1[%c62] : memref<256xf32, #tpu.memory_space<smem>>
    %c63 = arith.constant 63 : index
    %63 = memref.load %arg1[%c63] : memref<256xf32, #tpu.memory_space<smem>>
    %c64 = arith.constant 64 : index
    %64 = memref.load %arg1[%c64] : memref<256xf32, #tpu.memory_space<smem>>
    %c65 = arith.constant 65 : index
    %65 = memref.load %arg1[%c65] : memref<256xf32, #tpu.memory_space<smem>>
    %c66 = arith.constant 66 : index
    %66 = memref.load %arg1[%c66] : memref<256xf32, #tpu.memory_space<smem>>
    %c67 = arith.constant 67 : index
    %67 = memref.load %arg1[%c67] : memref<256xf32, #tpu.memory_space<smem>>
    %c68 = arith.constant 68 : index
    %68 = memref.load %arg1[%c68] : memref<256xf32, #tpu.memory_space<smem>>
    %c69 = arith.constant 69 : index
    %69 = memref.load %arg1[%c69] : memref<256xf32, #tpu.memory_space<smem>>
    %c70 = arith.constant 70 : index
    %70 = memref.load %arg1[%c70] : memref<256xf32, #tpu.memory_space<smem>>
    %c71 = arith.constant 71 : index
    %71 = memref.load %arg1[%c71] : memref<256xf32, #tpu.memory_space<smem>>
    %c72 = arith.constant 72 : index
    %72 = memref.load %arg1[%c72] : memref<256xf32, #tpu.memory_space<smem>>
    %c73 = arith.constant 73 : index
    %73 = memref.load %arg1[%c73] : memref<256xf32, #tpu.memory_space<smem>>
    %c74 = arith.constant 74 : index
    %74 = memref.load %arg1[%c74] : memref<256xf32, #tpu.memory_space<smem>>
    %c75 = arith.constant 75 : index
    %75 = memref.load %arg1[%c75] : memref<256xf32, #tpu.memory_space<smem>>
    %c76 = arith.constant 76 : index
    %76 = memref.load %arg1[%c76] : memref<256xf32, #tpu.memory_space<smem>>
    %c77 = arith.constant 77 : index
    %77 = memref.load %arg1[%c77] : memref<256xf32, #tpu.memory_space<smem>>
    %c78 = arith.constant 78 : index
    %78 = memref.load %arg1[%c78] : memref<256xf32, #tpu.memory_space<smem>>
    %c79 = arith.constant 79 : index
    %79 = memref.load %arg1[%c79] : memref<256xf32, #tpu.memory_space<smem>>
    %c80 = arith.constant 80 : index
    %80 = memref.load %arg1[%c80] : memref<256xf32, #tpu.memory_space<smem>>
    %c81 = arith.constant 81 : index
    %81 = memref.load %arg1[%c81] : memref<256xf32, #tpu.memory_space<smem>>
    %c82 = arith.constant 82 : index
    %82 = memref.load %arg1[%c82] : memref<256xf32, #tpu.memory_space<smem>>
    %c83 = arith.constant 83 : index
    %83 = memref.load %arg1[%c83] : memref<256xf32, #tpu.memory_space<smem>>
    %c84 = arith.constant 84 : index
    %84 = memref.load %arg1[%c84] : memref<256xf32, #tpu.memory_space<smem>>
    %c85 = arith.constant 85 : index
    %85 = memref.load %arg1[%c85] : memref<256xf32, #tpu.memory_space<smem>>
    %c86 = arith.constant 86 : index
    %86 = memref.load %arg1[%c86] : memref<256xf32, #tpu.memory_space<smem>>
    %c87 = arith.constant 87 : index
    %87 = memref.load %arg1[%c87] : memref<256xf32, #tpu.memory_space<smem>>
    %c88 = arith.constant 88 : index
    %88 = memref.load %arg1[%c88] : memref<256xf32, #tpu.memory_space<smem>>
    %c89 = arith.constant 89 : index
    %89 = memref.load %arg1[%c89] : memref<256xf32, #tpu.memory_space<smem>>
    %c90 = arith.constant 90 : index
    %90 = memref.load %arg1[%c90] : memref<256xf32, #tpu.memory_space<smem>>
    %c91 = arith.constant 91 : index
    %91 = memref.load %arg1[%c91] : memref<256xf32, #tpu.memory_space<smem>>
    %c92 = arith.constant 92 : index
    %92 = memref.load %arg1[%c92] : memref<256xf32, #tpu.memory_space<smem>>
    %c93 = arith.constant 93 : index
    %93 = memref.load %arg1[%c93] : memref<256xf32, #tpu.memory_space<smem>>
    %c94 = arith.constant 94 : index
    %94 = memref.load %arg1[%c94] : memref<256xf32, #tpu.memory_space<smem>>
    %c95 = arith.constant 95 : index
    %95 = memref.load %arg1[%c95] : memref<256xf32, #tpu.memory_space<smem>>
    %c96 = arith.constant 96 : index
    %96 = memref.load %arg1[%c96] : memref<256xf32, #tpu.memory_space<smem>>
    %c97 = arith.constant 97 : index
    %97 = memref.load %arg1[%c97] : memref<256xf32, #tpu.memory_space<smem>>
    %c98 = arith.constant 98 : index
    %98 = memref.load %arg1[%c98] : memref<256xf32, #tpu.memory_space<smem>>
    %c99 = arith.constant 99 : index
    %99 = memref.load %arg1[%c99] : memref<256xf32, #tpu.memory_space<smem>>
    %c100 = arith.constant 100 : index
    %100 = memref.load %arg1[%c100] : memref<256xf32, #tpu.memory_space<smem>>
    %c101 = arith.constant 101 : index
    %101 = memref.load %arg1[%c101] : memref<256xf32, #tpu.memory_space<smem>>
    %c102 = arith.constant 102 : index
    %102 = memref.load %arg1[%c102] : memref<256xf32, #tpu.memory_space<smem>>
    %c103 = arith.constant 103 : index
    %103 = memref.load %arg1[%c103] : memref<256xf32, #tpu.memory_space<smem>>
    %c104 = arith.constant 104 : index
    %104 = memref.load %arg1[%c104] : memref<256xf32, #tpu.memory_space<smem>>
    %c105 = arith.constant 105 : index
    %105 = memref.load %arg1[%c105] : memref<256xf32, #tpu.memory_space<smem>>
    %c106 = arith.constant 106 : index
    %106 = memref.load %arg1[%c106] : memref<256xf32, #tpu.memory_space<smem>>
    %c107 = arith.constant 107 : index
    %107 = memref.load %arg1[%c107] : memref<256xf32, #tpu.memory_space<smem>>
    %c108 = arith.constant 108 : index
    %108 = memref.load %arg1[%c108] : memref<256xf32, #tpu.memory_space<smem>>
    %c109 = arith.constant 109 : index
    %109 = memref.load %arg1[%c109] : memref<256xf32, #tpu.memory_space<smem>>
    %c110 = arith.constant 110 : index
    %110 = memref.load %arg1[%c110] : memref<256xf32, #tpu.memory_space<smem>>
    %c111 = arith.constant 111 : index
    %111 = memref.load %arg1[%c111] : memref<256xf32, #tpu.memory_space<smem>>
    %c112 = arith.constant 112 : index
    %112 = memref.load %arg1[%c112] : memref<256xf32, #tpu.memory_space<smem>>
    %c113 = arith.constant 113 : index
    %113 = memref.load %arg1[%c113] : memref<256xf32, #tpu.memory_space<smem>>
    %c114 = arith.constant 114 : index
    %114 = memref.load %arg1[%c114] : memref<256xf32, #tpu.memory_space<smem>>
    %c115 = arith.constant 115 : index
    %115 = memref.load %arg1[%c115] : memref<256xf32, #tpu.memory_space<smem>>
    %c116 = arith.constant 116 : index
    %116 = memref.load %arg1[%c116] : memref<256xf32, #tpu.memory_space<smem>>
    %c117 = arith.constant 117 : index
    %117 = memref.load %arg1[%c117] : memref<256xf32, #tpu.memory_space<smem>>
    %c118 = arith.constant 118 : index
    %118 = memref.load %arg1[%c118] : memref<256xf32, #tpu.memory_space<smem>>
    %c119 = arith.constant 119 : index
    %119 = memref.load %arg1[%c119] : memref<256xf32, #tpu.memory_space<smem>>
    %c120 = arith.constant 120 : index
    %120 = memref.load %arg1[%c120] : memref<256xf32, #tpu.memory_space<smem>>
    %c121 = arith.constant 121 : index
    %121 = memref.load %arg1[%c121] : memref<256xf32, #tpu.memory_space<smem>>
    %c122 = arith.constant 122 : index
    %122 = memref.load %arg1[%c122] : memref<256xf32, #tpu.memory_space<smem>>
    %c123 = arith.constant 123 : index
    %123 = memref.load %arg1[%c123] : memref<256xf32, #tpu.memory_space<smem>>
    %c124 = arith.constant 124 : index
    %124 = memref.load %arg1[%c124] : memref<256xf32, #tpu.memory_space<smem>>
    %c125 = arith.constant 125 : index
    %125 = memref.load %arg1[%c125] : memref<256xf32, #tpu.memory_space<smem>>
    %c126 = arith.constant 126 : index
    %126 = memref.load %arg1[%c126] : memref<256xf32, #tpu.memory_space<smem>>
    %c127 = arith.constant 127 : index
    %127 = memref.load %arg1[%c127] : memref<256xf32, #tpu.memory_space<smem>>
    %c128 = arith.constant 128 : index
    %128 = memref.load %arg1[%c128] : memref<256xf32, #tpu.memory_space<smem>>
    %c129 = arith.constant 129 : index
    %129 = memref.load %arg1[%c129] : memref<256xf32, #tpu.memory_space<smem>>
    %c130 = arith.constant 130 : index
    %130 = memref.load %arg1[%c130] : memref<256xf32, #tpu.memory_space<smem>>
    %c131 = arith.constant 131 : index
    %131 = memref.load %arg1[%c131] : memref<256xf32, #tpu.memory_space<smem>>
    %c132 = arith.constant 132 : index
    %132 = memref.load %arg1[%c132] : memref<256xf32, #tpu.memory_space<smem>>
    %c133 = arith.constant 133 : index
    %133 = memref.load %arg1[%c133] : memref<256xf32, #tpu.memory_space<smem>>
    %c134 = arith.constant 134 : index
    %134 = memref.load %arg1[%c134] : memref<256xf32, #tpu.memory_space<smem>>
    %c135 = arith.constant 135 : index
    %135 = memref.load %arg1[%c135] : memref<256xf32, #tpu.memory_space<smem>>
    %c136 = arith.constant 136 : index
    %136 = memref.load %arg1[%c136] : memref<256xf32, #tpu.memory_space<smem>>
    %c137 = arith.constant 137 : index
    %137 = memref.load %arg1[%c137] : memref<256xf32, #tpu.memory_space<smem>>
    %c138 = arith.constant 138 : index
    %138 = memref.load %arg1[%c138] : memref<256xf32, #tpu.memory_space<smem>>
    %c139 = arith.constant 139 : index
    %139 = memref.load %arg1[%c139] : memref<256xf32, #tpu.memory_space<smem>>
    %c140 = arith.constant 140 : index
    %140 = memref.load %arg1[%c140] : memref<256xf32, #tpu.memory_space<smem>>
    %c141 = arith.constant 141 : index
    %141 = memref.load %arg1[%c141] : memref<256xf32, #tpu.memory_space<smem>>
    %c142 = arith.constant 142 : index
    %142 = memref.load %arg1[%c142] : memref<256xf32, #tpu.memory_space<smem>>
    %c143 = arith.constant 143 : index
    %143 = memref.load %arg1[%c143] : memref<256xf32, #tpu.memory_space<smem>>
    %c144 = arith.constant 144 : index
    %144 = memref.load %arg1[%c144] : memref<256xf32, #tpu.memory_space<smem>>
    %c145 = arith.constant 145 : index
    %145 = memref.load %arg1[%c145] : memref<256xf32, #tpu.memory_space<smem>>
    %c146 = arith.constant 146 : index
    %146 = memref.load %arg1[%c146] : memref<256xf32, #tpu.memory_space<smem>>
    %c147 = arith.constant 147 : index
    %147 = memref.load %arg1[%c147] : memref<256xf32, #tpu.memory_space<smem>>
    %c148 = arith.constant 148 : index
    %148 = memref.load %arg1[%c148] : memref<256xf32, #tpu.memory_space<smem>>
    %c149 = arith.constant 149 : index
    %149 = memref.load %arg1[%c149] : memref<256xf32, #tpu.memory_space<smem>>
    %c150 = arith.constant 150 : index
    %150 = memref.load %arg1[%c150] : memref<256xf32, #tpu.memory_space<smem>>
    %c151 = arith.constant 151 : index
    %151 = memref.load %arg1[%c151] : memref<256xf32, #tpu.memory_space<smem>>
    %c152 = arith.constant 152 : index
    %152 = memref.load %arg1[%c152] : memref<256xf32, #tpu.memory_space<smem>>
    %c153 = arith.constant 153 : index
    %153 = memref.load %arg1[%c153] : memref<256xf32, #tpu.memory_space<smem>>
    %c154 = arith.constant 154 : index
    %154 = memref.load %arg1[%c154] : memref<256xf32, #tpu.memory_space<smem>>
    %c155 = arith.constant 155 : index
    %155 = memref.load %arg1[%c155] : memref<256xf32, #tpu.memory_space<smem>>
    %c156 = arith.constant 156 : index
    %156 = memref.load %arg1[%c156] : memref<256xf32, #tpu.memory_space<smem>>
    %c157 = arith.constant 157 : index
    %157 = memref.load %arg1[%c157] : memref<256xf32, #tpu.memory_space<smem>>
    %c158 = arith.constant 158 : index
    %158 = memref.load %arg1[%c158] : memref<256xf32, #tpu.memory_space<smem>>
    %c159 = arith.constant 159 : index
    %159 = memref.load %arg1[%c159] : memref<256xf32, #tpu.memory_space<smem>>
    %c160 = arith.constant 160 : index
    %160 = memref.load %arg1[%c160] : memref<256xf32, #tpu.memory_space<smem>>
    %c161 = arith.constant 161 : index
    %161 = memref.load %arg1[%c161] : memref<256xf32, #tpu.memory_space<smem>>
    %c162 = arith.constant 162 : index
    %162 = memref.load %arg1[%c162] : memref<256xf32, #tpu.memory_space<smem>>
    %c163 = arith.constant 163 : index
    %163 = memref.load %arg1[%c163] : memref<256xf32, #tpu.memory_space<smem>>
    %c164 = arith.constant 164 : index
    %164 = memref.load %arg1[%c164] : memref<256xf32, #tpu.memory_space<smem>>
    %c165 = arith.constant 165 : index
    %165 = memref.load %arg1[%c165] : memref<256xf32, #tpu.memory_space<smem>>
    %c166 = arith.constant 166 : index
    %166 = memref.load %arg1[%c166] : memref<256xf32, #tpu.memory_space<smem>>
    %c167 = arith.constant 167 : index
    %167 = memref.load %arg1[%c167] : memref<256xf32, #tpu.memory_space<smem>>
    %c168 = arith.constant 168 : index
    %168 = memref.load %arg1[%c168] : memref<256xf32, #tpu.memory_space<smem>>
    %c169 = arith.constant 169 : index
    %169 = memref.load %arg1[%c169] : memref<256xf32, #tpu.memory_space<smem>>
    %c170 = arith.constant 170 : index
    %170 = memref.load %arg1[%c170] : memref<256xf32, #tpu.memory_space<smem>>
    %c171 = arith.constant 171 : index
    %171 = memref.load %arg1[%c171] : memref<256xf32, #tpu.memory_space<smem>>
    %c172 = arith.constant 172 : index
    %172 = memref.load %arg1[%c172] : memref<256xf32, #tpu.memory_space<smem>>
    %c0_0 = arith.constant 0 : index
    %c0_1 = arith.constant 0 : index
    %c0_2 = arith.constant 0 : index
    %173 = vector.load %arg2[%c0_0, %c0_1, %c0_2] : memref<2x1x128xf32, #tpu.memory_space<vmem>>, vector<1x1x128xf32>
    %174 = vector.shape_cast %173 : vector<1x1x128xf32> to vector<1x128xf32>
    %c1_3 = arith.constant 1 : index
    %c0_4 = arith.constant 0 : index
    %c0_5 = arith.constant 0 : index
    %175 = vector.load %arg2[%c1_3, %c0_4, %c0_5] : memref<2x1x128xf32, #tpu.memory_space<vmem>>, vector<1x1x128xf32>
    %176 = vector.shape_cast %175 : vector<1x1x128xf32> to vector<1x128xf32>
    %177 = vector.broadcast %0 : f32 to vector<1x128xf32>
    %178 = arith.mulf %174, %177 : vector<1x128xf32>
    %179 = vector.broadcast %1 : f32 to vector<1x128xf32>
    %180 = arith.mulf %176, %179 : vector<1x128xf32>
    %181 = arith.addf %178, %180 : vector<1x128xf32>
    %182 = vector.broadcast %20 : f32 to vector<1x128xf32>
    %183 = arith.addf %181, %182 : vector<1x128xf32>
    %cst = arith.constant 0.000000e+00 : f32
    %184 = vector.broadcast %cst : f32 to vector<1x128xf32>
    %185 = arith.maximumf %183, %184 : vector<1x128xf32>
    %186 = vector.broadcast %2 : f32 to vector<1x128xf32>
    %187 = arith.mulf %174, %186 : vector<1x128xf32>
    %188 = vector.broadcast %3 : f32 to vector<1x128xf32>
    %189 = arith.mulf %176, %188 : vector<1x128xf32>
    %190 = arith.addf %187, %189 : vector<1x128xf32>
    %191 = vector.broadcast %21 : f32 to vector<1x128xf32>
    %192 = arith.addf %190, %191 : vector<1x128xf32>
    %cst_6 = arith.constant 0.000000e+00 : f32
    %193 = vector.broadcast %cst_6 : f32 to vector<1x128xf32>
    %194 = arith.maximumf %192, %193 : vector<1x128xf32>
    %195 = vector.broadcast %4 : f32 to vector<1x128xf32>
    %196 = arith.mulf %174, %195 : vector<1x128xf32>
    %197 = vector.broadcast %5 : f32 to vector<1x128xf32>
    %198 = arith.mulf %176, %197 : vector<1x128xf32>
    %199 = arith.addf %196, %198 : vector<1x128xf32>
    %200 = vector.broadcast %22 : f32 to vector<1x128xf32>
    %201 = arith.addf %199, %200 : vector<1x128xf32>
    %cst_7 = arith.constant 0.000000e+00 : f32
    %202 = vector.broadcast %cst_7 : f32 to vector<1x128xf32>
    %203 = arith.maximumf %201, %202 : vector<1x128xf32>
    %204 = vector.broadcast %6 : f32 to vector<1x128xf32>
    %205 = arith.mulf %174, %204 : vector<1x128xf32>
    %206 = vector.broadcast %7 : f32 to vector<1x128xf32>
    %207 = arith.mulf %176, %206 : vector<1x128xf32>
    %208 = arith.addf %205, %207 : vector<1x128xf32>
    %209 = vector.broadcast %23 : f32 to vector<1x128xf32>
    %210 = arith.addf %208, %209 : vector<1x128xf32>
    %cst_8 = arith.constant 0.000000e+00 : f32
    %211 = vector.broadcast %cst_8 : f32 to vector<1x128xf32>
    %212 = arith.maximumf %210, %211 : vector<1x128xf32>
    %213 = vector.broadcast %8 : f32 to vector<1x128xf32>
    %214 = arith.mulf %174, %213 : vector<1x128xf32>
    %215 = vector.broadcast %9 : f32 to vector<1x128xf32>
    %216 = arith.mulf %176, %215 : vector<1x128xf32>
    %217 = arith.addf %214, %216 : vector<1x128xf32>
    %218 = vector.broadcast %24 : f32 to vector<1x128xf32>
    %219 = arith.addf %217, %218 : vector<1x128xf32>
    %cst_9 = arith.constant 0.000000e+00 : f32
    %220 = vector.broadcast %cst_9 : f32 to vector<1x128xf32>
    %221 = arith.maximumf %219, %220 : vector<1x128xf32>
    %222 = vector.broadcast %10 : f32 to vector<1x128xf32>
    %223 = arith.mulf %174, %222 : vector<1x128xf32>
    %224 = vector.broadcast %11 : f32 to vector<1x128xf32>
    %225 = arith.mulf %176, %224 : vector<1x128xf32>
    %226 = arith.addf %223, %225 : vector<1x128xf32>
    %227 = vector.broadcast %25 : f32 to vector<1x128xf32>
    %228 = arith.addf %226, %227 : vector<1x128xf32>
    %cst_10 = arith.constant 0.000000e+00 : f32
    %229 = vector.broadcast %cst_10 : f32 to vector<1x128xf32>
    %230 = arith.maximumf %228, %229 : vector<1x128xf32>
    %231 = vector.broadcast %12 : f32 to vector<1x128xf32>
    %232 = arith.mulf %174, %231 : vector<1x128xf32>
    %233 = vector.broadcast %13 : f32 to vector<1x128xf32>
    %234 = arith.mulf %176, %233 : vector<1x128xf32>
    %235 = arith.addf %232, %234 : vector<1x128xf32>
    %236 = vector.broadcast %26 : f32 to vector<1x128xf32>
    %237 = arith.addf %235, %236 : vector<1x128xf32>
    %cst_11 = arith.constant 0.000000e+00 : f32
    %238 = vector.broadcast %cst_11 : f32 to vector<1x128xf32>
    %239 = arith.maximumf %237, %238 : vector<1x128xf32>
    %240 = vector.broadcast %14 : f32 to vector<1x128xf32>
    %241 = arith.mulf %174, %240 : vector<1x128xf32>
    %242 = vector.broadcast %15 : f32 to vector<1x128xf32>
    %243 = arith.mulf %176, %242 : vector<1x128xf32>
    %244 = arith.addf %241, %243 : vector<1x128xf32>
    %245 = vector.broadcast %27 : f32 to vector<1x128xf32>
    %246 = arith.addf %244, %245 : vector<1x128xf32>
    %cst_12 = arith.constant 0.000000e+00 : f32
    %247 = vector.broadcast %cst_12 : f32 to vector<1x128xf32>
    %248 = arith.maximumf %246, %247 : vector<1x128xf32>
    %249 = vector.broadcast %16 : f32 to vector<1x128xf32>
    %250 = arith.mulf %174, %249 : vector<1x128xf32>
    %251 = vector.broadcast %17 : f32 to vector<1x128xf32>
    %252 = arith.mulf %176, %251 : vector<1x128xf32>
    %253 = arith.addf %250, %252 : vector<1x128xf32>
    %254 = vector.broadcast %28 : f32 to vector<1x128xf32>
    %255 = arith.addf %253, %254 : vector<1x128xf32>
    %cst_13 = arith.constant 0.000000e+00 : f32
    %256 = vector.broadcast %cst_13 : f32 to vector<1x128xf32>
    %257 = arith.maximumf %255, %256 : vector<1x128xf32>
    %258 = vector.broadcast %18 : f32 to vector<1x128xf32>
    %259 = arith.mulf %174, %258 : vector<1x128xf32>
    %260 = vector.broadcast %19 : f32 to vector<1x128xf32>
    %261 = arith.mulf %176, %260 : vector<1x128xf32>
    %262 = arith.addf %259, %261 : vector<1x128xf32>
    %263 = vector.broadcast %29 : f32 to vector<1x128xf32>
    %264 = arith.addf %262, %263 : vector<1x128xf32>
    %cst_14 = arith.constant 0.000000e+00 : f32
    %265 = vector.broadcast %cst_14 : f32 to vector<1x128xf32>
    %266 = arith.maximumf %264, %265 : vector<1x128xf32>
    %267 = vector.broadcast %30 : f32 to vector<1x128xf32>
    %268 = arith.mulf %185, %267 : vector<1x128xf32>
    %269 = vector.broadcast %31 : f32 to vector<1x128xf32>
    %270 = arith.mulf %194, %269 : vector<1x128xf32>
    %271 = arith.addf %268, %270 : vector<1x128xf32>
    %272 = vector.broadcast %32 : f32 to vector<1x128xf32>
    %273 = arith.mulf %203, %272 : vector<1x128xf32>
    %274 = arith.addf %271, %273 : vector<1x128xf32>
    %275 = vector.broadcast %33 : f32 to vector<1x128xf32>
    %276 = arith.mulf %212, %275 : vector<1x128xf32>
    %277 = arith.addf %274, %276 : vector<1x128xf32>
    %278 = vector.broadcast %34 : f32 to vector<1x128xf32>
    %279 = arith.mulf %221, %278 : vector<1x128xf32>
    %280 = arith.addf %277, %279 : vector<1x128xf32>
    %281 = vector.broadcast %35 : f32 to vector<1x128xf32>
    %282 = arith.mulf %230, %281 : vector<1x128xf32>
    %283 = arith.addf %280, %282 : vector<1x128xf32>
    %284 = vector.broadcast %36 : f32 to vector<1x128xf32>
    %285 = arith.mulf %239, %284 : vector<1x128xf32>
    %286 = arith.addf %283, %285 : vector<1x128xf32>
    %287 = vector.broadcast %37 : f32 to vector<1x128xf32>
    %288 = arith.mulf %248, %287 : vector<1x128xf32>
    %289 = arith.addf %286, %288 : vector<1x128xf32>
    %290 = vector.broadcast %38 : f32 to vector<1x128xf32>
    %291 = arith.mulf %257, %290 : vector<1x128xf32>
    %292 = arith.addf %289, %291 : vector<1x128xf32>
    %293 = vector.broadcast %39 : f32 to vector<1x128xf32>
    %294 = arith.mulf %266, %293 : vector<1x128xf32>
    %295 = arith.addf %292, %294 : vector<1x128xf32>
    %296 = vector.broadcast %130 : f32 to vector<1x128xf32>
    %297 = arith.addf %295, %296 : vector<1x128xf32>
    %cst_15 = arith.constant 0.000000e+00 : f32
    %298 = vector.broadcast %cst_15 : f32 to vector<1x128xf32>
    %299 = arith.maximumf %297, %298 : vector<1x128xf32>
    %300 = vector.broadcast %40 : f32 to vector<1x128xf32>
    %301 = arith.mulf %185, %300 : vector<1x128xf32>
    %302 = vector.broadcast %41 : f32 to vector<1x128xf32>
    %303 = arith.mulf %194, %302 : vector<1x128xf32>
    %304 = arith.addf %301, %303 : vector<1x128xf32>
    %305 = vector.broadcast %42 : f32 to vector<1x128xf32>
    %306 = arith.mulf %203, %305 : vector<1x128xf32>
    %307 = arith.addf %304, %306 : vector<1x128xf32>
    %308 = vector.broadcast %43 : f32 to vector<1x128xf32>
    %309 = arith.mulf %212, %308 : vector<1x128xf32>
    %310 = arith.addf %307, %309 : vector<1x128xf32>
    %311 = vector.broadcast %44 : f32 to vector<1x128xf32>
    %312 = arith.mulf %221, %311 : vector<1x128xf32>
    %313 = arith.addf %310, %312 : vector<1x128xf32>
    %314 = vector.broadcast %45 : f32 to vector<1x128xf32>
    %315 = arith.mulf %230, %314 : vector<1x128xf32>
    %316 = arith.addf %313, %315 : vector<1x128xf32>
    %317 = vector.broadcast %46 : f32 to vector<1x128xf32>
    %318 = arith.mulf %239, %317 : vector<1x128xf32>
    %319 = arith.addf %316, %318 : vector<1x128xf32>
    %320 = vector.broadcast %47 : f32 to vector<1x128xf32>
    %321 = arith.mulf %248, %320 : vector<1x128xf32>
    %322 = arith.addf %319, %321 : vector<1x128xf32>
    %323 = vector.broadcast %48 : f32 to vector<1x128xf32>
    %324 = arith.mulf %257, %323 : vector<1x128xf32>
    %325 = arith.addf %322, %324 : vector<1x128xf32>
    %326 = vector.broadcast %49 : f32 to vector<1x128xf32>
    %327 = arith.mulf %266, %326 : vector<1x128xf32>
    %328 = arith.addf %325, %327 : vector<1x128xf32>
    %329 = vector.broadcast %131 : f32 to vector<1x128xf32>
    %330 = arith.addf %328, %329 : vector<1x128xf32>
    %cst_16 = arith.constant 0.000000e+00 : f32
    %331 = vector.broadcast %cst_16 : f32 to vector<1x128xf32>
    %332 = arith.maximumf %330, %331 : vector<1x128xf32>
    %333 = vector.broadcast %50 : f32 to vector<1x128xf32>
    %334 = arith.mulf %185, %333 : vector<1x128xf32>
    %335 = vector.broadcast %51 : f32 to vector<1x128xf32>
    %336 = arith.mulf %194, %335 : vector<1x128xf32>
    %337 = arith.addf %334, %336 : vector<1x128xf32>
    %338 = vector.broadcast %52 : f32 to vector<1x128xf32>
    %339 = arith.mulf %203, %338 : vector<1x128xf32>
    %340 = arith.addf %337, %339 : vector<1x128xf32>
    %341 = vector.broadcast %53 : f32 to vector<1x128xf32>
    %342 = arith.mulf %212, %341 : vector<1x128xf32>
    %343 = arith.addf %340, %342 : vector<1x128xf32>
    %344 = vector.broadcast %54 : f32 to vector<1x128xf32>
    %345 = arith.mulf %221, %344 : vector<1x128xf32>
    %346 = arith.addf %343, %345 : vector<1x128xf32>
    %347 = vector.broadcast %55 : f32 to vector<1x128xf32>
    %348 = arith.mulf %230, %347 : vector<1x128xf32>
    %349 = arith.addf %346, %348 : vector<1x128xf32>
    %350 = vector.broadcast %56 : f32 to vector<1x128xf32>
    %351 = arith.mulf %239, %350 : vector<1x128xf32>
    %352 = arith.addf %349, %351 : vector<1x128xf32>
    %353 = vector.broadcast %57 : f32 to vector<1x128xf32>
    %354 = arith.mulf %248, %353 : vector<1x128xf32>
    %355 = arith.addf %352, %354 : vector<1x128xf32>
    %356 = vector.broadcast %58 : f32 to vector<1x128xf32>
    %357 = arith.mulf %257, %356 : vector<1x128xf32>
    %358 = arith.addf %355, %357 : vector<1x128xf32>
    %359 = vector.broadcast %59 : f32 to vector<1x128xf32>
    %360 = arith.mulf %266, %359 : vector<1x128xf32>
    %361 = arith.addf %358, %360 : vector<1x128xf32>
    %362 = vector.broadcast %132 : f32 to vector<1x128xf32>
    %363 = arith.addf %361, %362 : vector<1x128xf32>
    %cst_17 = arith.constant 0.000000e+00 : f32
    %364 = vector.broadcast %cst_17 : f32 to vector<1x128xf32>
    %365 = arith.maximumf %363, %364 : vector<1x128xf32>
    %366 = vector.broadcast %60 : f32 to vector<1x128xf32>
    %367 = arith.mulf %185, %366 : vector<1x128xf32>
    %368 = vector.broadcast %61 : f32 to vector<1x128xf32>
    %369 = arith.mulf %194, %368 : vector<1x128xf32>
    %370 = arith.addf %367, %369 : vector<1x128xf32>
    %371 = vector.broadcast %62 : f32 to vector<1x128xf32>
    %372 = arith.mulf %203, %371 : vector<1x128xf32>
    %373 = arith.addf %370, %372 : vector<1x128xf32>
    %374 = vector.broadcast %63 : f32 to vector<1x128xf32>
    %375 = arith.mulf %212, %374 : vector<1x128xf32>
    %376 = arith.addf %373, %375 : vector<1x128xf32>
    %377 = vector.broadcast %64 : f32 to vector<1x128xf32>
    %378 = arith.mulf %221, %377 : vector<1x128xf32>
    %379 = arith.addf %376, %378 : vector<1x128xf32>
    %380 = vector.broadcast %65 : f32 to vector<1x128xf32>
    %381 = arith.mulf %230, %380 : vector<1x128xf32>
    %382 = arith.addf %379, %381 : vector<1x128xf32>
    %383 = vector.broadcast %66 : f32 to vector<1x128xf32>
    %384 = arith.mulf %239, %383 : vector<1x128xf32>
    %385 = arith.addf %382, %384 : vector<1x128xf32>
    %386 = vector.broadcast %67 : f32 to vector<1x128xf32>
    %387 = arith.mulf %248, %386 : vector<1x128xf32>
    %388 = arith.addf %385, %387 : vector<1x128xf32>
    %389 = vector.broadcast %68 : f32 to vector<1x128xf32>
    %390 = arith.mulf %257, %389 : vector<1x128xf32>
    %391 = arith.addf %388, %390 : vector<1x128xf32>
    %392 = vector.broadcast %69 : f32 to vector<1x128xf32>
    %393 = arith.mulf %266, %392 : vector<1x128xf32>
    %394 = arith.addf %391, %393 : vector<1x128xf32>
    %395 = vector.broadcast %133 : f32 to vector<1x128xf32>
    %396 = arith.addf %394, %395 : vector<1x128xf32>
    %cst_18 = arith.constant 0.000000e+00 : f32
    %397 = vector.broadcast %cst_18 : f32 to vector<1x128xf32>
    %398 = arith.maximumf %396, %397 : vector<1x128xf32>
    %399 = vector.broadcast %70 : f32 to vector<1x128xf32>
    %400 = arith.mulf %185, %399 : vector<1x128xf32>
    %401 = vector.broadcast %71 : f32 to vector<1x128xf32>
    %402 = arith.mulf %194, %401 : vector<1x128xf32>
    %403 = arith.addf %400, %402 : vector<1x128xf32>
    %404 = vector.broadcast %72 : f32 to vector<1x128xf32>
    %405 = arith.mulf %203, %404 : vector<1x128xf32>
    %406 = arith.addf %403, %405 : vector<1x128xf32>
    %407 = vector.broadcast %73 : f32 to vector<1x128xf32>
    %408 = arith.mulf %212, %407 : vector<1x128xf32>
    %409 = arith.addf %406, %408 : vector<1x128xf32>
    %410 = vector.broadcast %74 : f32 to vector<1x128xf32>
    %411 = arith.mulf %221, %410 : vector<1x128xf32>
    %412 = arith.addf %409, %411 : vector<1x128xf32>
    %413 = vector.broadcast %75 : f32 to vector<1x128xf32>
    %414 = arith.mulf %230, %413 : vector<1x128xf32>
    %415 = arith.addf %412, %414 : vector<1x128xf32>
    %416 = vector.broadcast %76 : f32 to vector<1x128xf32>
    %417 = arith.mulf %239, %416 : vector<1x128xf32>
    %418 = arith.addf %415, %417 : vector<1x128xf32>
    %419 = vector.broadcast %77 : f32 to vector<1x128xf32>
    %420 = arith.mulf %248, %419 : vector<1x128xf32>
    %421 = arith.addf %418, %420 : vector<1x128xf32>
    %422 = vector.broadcast %78 : f32 to vector<1x128xf32>
    %423 = arith.mulf %257, %422 : vector<1x128xf32>
    %424 = arith.addf %421, %423 : vector<1x128xf32>
    %425 = vector.broadcast %79 : f32 to vector<1x128xf32>
    %426 = arith.mulf %266, %425 : vector<1x128xf32>
    %427 = arith.addf %424, %426 : vector<1x128xf32>
    %428 = vector.broadcast %134 : f32 to vector<1x128xf32>
    %429 = arith.addf %427, %428 : vector<1x128xf32>
    %cst_19 = arith.constant 0.000000e+00 : f32
    %430 = vector.broadcast %cst_19 : f32 to vector<1x128xf32>
    %431 = arith.maximumf %429, %430 : vector<1x128xf32>
    %432 = vector.broadcast %80 : f32 to vector<1x128xf32>
    %433 = arith.mulf %185, %432 : vector<1x128xf32>
    %434 = vector.broadcast %81 : f32 to vector<1x128xf32>
    %435 = arith.mulf %194, %434 : vector<1x128xf32>
    %436 = arith.addf %433, %435 : vector<1x128xf32>
    %437 = vector.broadcast %82 : f32 to vector<1x128xf32>
    %438 = arith.mulf %203, %437 : vector<1x128xf32>
    %439 = arith.addf %436, %438 : vector<1x128xf32>
    %440 = vector.broadcast %83 : f32 to vector<1x128xf32>
    %441 = arith.mulf %212, %440 : vector<1x128xf32>
    %442 = arith.addf %439, %441 : vector<1x128xf32>
    %443 = vector.broadcast %84 : f32 to vector<1x128xf32>
    %444 = arith.mulf %221, %443 : vector<1x128xf32>
    %445 = arith.addf %442, %444 : vector<1x128xf32>
    %446 = vector.broadcast %85 : f32 to vector<1x128xf32>
    %447 = arith.mulf %230, %446 : vector<1x128xf32>
    %448 = arith.addf %445, %447 : vector<1x128xf32>
    %449 = vector.broadcast %86 : f32 to vector<1x128xf32>
    %450 = arith.mulf %239, %449 : vector<1x128xf32>
    %451 = arith.addf %448, %450 : vector<1x128xf32>
    %452 = vector.broadcast %87 : f32 to vector<1x128xf32>
    %453 = arith.mulf %248, %452 : vector<1x128xf32>
    %454 = arith.addf %451, %453 : vector<1x128xf32>
    %455 = vector.broadcast %88 : f32 to vector<1x128xf32>
    %456 = arith.mulf %257, %455 : vector<1x128xf32>
    %457 = arith.addf %454, %456 : vector<1x128xf32>
    %458 = vector.broadcast %89 : f32 to vector<1x128xf32>
    %459 = arith.mulf %266, %458 : vector<1x128xf32>
    %460 = arith.addf %457, %459 : vector<1x128xf32>
    %461 = vector.broadcast %135 : f32 to vector<1x128xf32>
    %462 = arith.addf %460, %461 : vector<1x128xf32>
    %cst_20 = arith.constant 0.000000e+00 : f32
    %463 = vector.broadcast %cst_20 : f32 to vector<1x128xf32>
    %464 = arith.maximumf %462, %463 : vector<1x128xf32>
    %465 = vector.broadcast %90 : f32 to vector<1x128xf32>
    %466 = arith.mulf %185, %465 : vector<1x128xf32>
    %467 = vector.broadcast %91 : f32 to vector<1x128xf32>
    %468 = arith.mulf %194, %467 : vector<1x128xf32>
    %469 = arith.addf %466, %468 : vector<1x128xf32>
    %470 = vector.broadcast %92 : f32 to vector<1x128xf32>
    %471 = arith.mulf %203, %470 : vector<1x128xf32>
    %472 = arith.addf %469, %471 : vector<1x128xf32>
    %473 = vector.broadcast %93 : f32 to vector<1x128xf32>
    %474 = arith.mulf %212, %473 : vector<1x128xf32>
    %475 = arith.addf %472, %474 : vector<1x128xf32>
    %476 = vector.broadcast %94 : f32 to vector<1x128xf32>
    %477 = arith.mulf %221, %476 : vector<1x128xf32>
    %478 = arith.addf %475, %477 : vector<1x128xf32>
    %479 = vector.broadcast %95 : f32 to vector<1x128xf32>
    %480 = arith.mulf %230, %479 : vector<1x128xf32>
    %481 = arith.addf %478, %480 : vector<1x128xf32>
    %482 = vector.broadcast %96 : f32 to vector<1x128xf32>
    %483 = arith.mulf %239, %482 : vector<1x128xf32>
    %484 = arith.addf %481, %483 : vector<1x128xf32>
    %485 = vector.broadcast %97 : f32 to vector<1x128xf32>
    %486 = arith.mulf %248, %485 : vector<1x128xf32>
    %487 = arith.addf %484, %486 : vector<1x128xf32>
    %488 = vector.broadcast %98 : f32 to vector<1x128xf32>
    %489 = arith.mulf %257, %488 : vector<1x128xf32>
    %490 = arith.addf %487, %489 : vector<1x128xf32>
    %491 = vector.broadcast %99 : f32 to vector<1x128xf32>
    %492 = arith.mulf %266, %491 : vector<1x128xf32>
    %493 = arith.addf %490, %492 : vector<1x128xf32>
    %494 = vector.broadcast %136 : f32 to vector<1x128xf32>
    %495 = arith.addf %493, %494 : vector<1x128xf32>
    %cst_21 = arith.constant 0.000000e+00 : f32
    %496 = vector.broadcast %cst_21 : f32 to vector<1x128xf32>
    %497 = arith.maximumf %495, %496 : vector<1x128xf32>
    %498 = vector.broadcast %100 : f32 to vector<1x128xf32>
    %499 = arith.mulf %185, %498 : vector<1x128xf32>
    %500 = vector.broadcast %101 : f32 to vector<1x128xf32>
    %501 = arith.mulf %194, %500 : vector<1x128xf32>
    %502 = arith.addf %499, %501 : vector<1x128xf32>
    %503 = vector.broadcast %102 : f32 to vector<1x128xf32>
    %504 = arith.mulf %203, %503 : vector<1x128xf32>
    %505 = arith.addf %502, %504 : vector<1x128xf32>
    %506 = vector.broadcast %103 : f32 to vector<1x128xf32>
    %507 = arith.mulf %212, %506 : vector<1x128xf32>
    %508 = arith.addf %505, %507 : vector<1x128xf32>
    %509 = vector.broadcast %104 : f32 to vector<1x128xf32>
    %510 = arith.mulf %221, %509 : vector<1x128xf32>
    %511 = arith.addf %508, %510 : vector<1x128xf32>
    %512 = vector.broadcast %105 : f32 to vector<1x128xf32>
    %513 = arith.mulf %230, %512 : vector<1x128xf32>
    %514 = arith.addf %511, %513 : vector<1x128xf32>
    %515 = vector.broadcast %106 : f32 to vector<1x128xf32>
    %516 = arith.mulf %239, %515 : vector<1x128xf32>
    %517 = arith.addf %514, %516 : vector<1x128xf32>
    %518 = vector.broadcast %107 : f32 to vector<1x128xf32>
    %519 = arith.mulf %248, %518 : vector<1x128xf32>
    %520 = arith.addf %517, %519 : vector<1x128xf32>
    %521 = vector.broadcast %108 : f32 to vector<1x128xf32>
    %522 = arith.mulf %257, %521 : vector<1x128xf32>
    %523 = arith.addf %520, %522 : vector<1x128xf32>
    %524 = vector.broadcast %109 : f32 to vector<1x128xf32>
    %525 = arith.mulf %266, %524 : vector<1x128xf32>
    %526 = arith.addf %523, %525 : vector<1x128xf32>
    %527 = vector.broadcast %137 : f32 to vector<1x128xf32>
    %528 = arith.addf %526, %527 : vector<1x128xf32>
    %cst_22 = arith.constant 0.000000e+00 : f32
    %529 = vector.broadcast %cst_22 : f32 to vector<1x128xf32>
    %530 = arith.maximumf %528, %529 : vector<1x128xf32>
    %531 = vector.broadcast %110 : f32 to vector<1x128xf32>
    %532 = arith.mulf %185, %531 : vector<1x128xf32>
    %533 = vector.broadcast %111 : f32 to vector<1x128xf32>
    %534 = arith.mulf %194, %533 : vector<1x128xf32>
    %535 = arith.addf %532, %534 : vector<1x128xf32>
    %536 = vector.broadcast %112 : f32 to vector<1x128xf32>
    %537 = arith.mulf %203, %536 : vector<1x128xf32>
    %538 = arith.addf %535, %537 : vector<1x128xf32>
    %539 = vector.broadcast %113 : f32 to vector<1x128xf32>
    %540 = arith.mulf %212, %539 : vector<1x128xf32>
    %541 = arith.addf %538, %540 : vector<1x128xf32>
    %542 = vector.broadcast %114 : f32 to vector<1x128xf32>
    %543 = arith.mulf %221, %542 : vector<1x128xf32>
    %544 = arith.addf %541, %543 : vector<1x128xf32>
    %545 = vector.broadcast %115 : f32 to vector<1x128xf32>
    %546 = arith.mulf %230, %545 : vector<1x128xf32>
    %547 = arith.addf %544, %546 : vector<1x128xf32>
    %548 = vector.broadcast %116 : f32 to vector<1x128xf32>
    %549 = arith.mulf %239, %548 : vector<1x128xf32>
    %550 = arith.addf %547, %549 : vector<1x128xf32>
    %551 = vector.broadcast %117 : f32 to vector<1x128xf32>
    %552 = arith.mulf %248, %551 : vector<1x128xf32>
    %553 = arith.addf %550, %552 : vector<1x128xf32>
    %554 = vector.broadcast %118 : f32 to vector<1x128xf32>
    %555 = arith.mulf %257, %554 : vector<1x128xf32>
    %556 = arith.addf %553, %555 : vector<1x128xf32>
    %557 = vector.broadcast %119 : f32 to vector<1x128xf32>
    %558 = arith.mulf %266, %557 : vector<1x128xf32>
    %559 = arith.addf %556, %558 : vector<1x128xf32>
    %560 = vector.broadcast %138 : f32 to vector<1x128xf32>
    %561 = arith.addf %559, %560 : vector<1x128xf32>
    %cst_23 = arith.constant 0.000000e+00 : f32
    %562 = vector.broadcast %cst_23 : f32 to vector<1x128xf32>
    %563 = arith.maximumf %561, %562 : vector<1x128xf32>
    %564 = vector.broadcast %120 : f32 to vector<1x128xf32>
    %565 = arith.mulf %185, %564 : vector<1x128xf32>
    %566 = vector.broadcast %121 : f32 to vector<1x128xf32>
    %567 = arith.mulf %194, %566 : vector<1x128xf32>
    %568 = arith.addf %565, %567 : vector<1x128xf32>
    %569 = vector.broadcast %122 : f32 to vector<1x128xf32>
    %570 = arith.mulf %203, %569 : vector<1x128xf32>
    %571 = arith.addf %568, %570 : vector<1x128xf32>
    %572 = vector.broadcast %123 : f32 to vector<1x128xf32>
    %573 = arith.mulf %212, %572 : vector<1x128xf32>
    %574 = arith.addf %571, %573 : vector<1x128xf32>
    %575 = vector.broadcast %124 : f32 to vector<1x128xf32>
    %576 = arith.mulf %221, %575 : vector<1x128xf32>
    %577 = arith.addf %574, %576 : vector<1x128xf32>
    %578 = vector.broadcast %125 : f32 to vector<1x128xf32>
    %579 = arith.mulf %230, %578 : vector<1x128xf32>
    %580 = arith.addf %577, %579 : vector<1x128xf32>
    %581 = vector.broadcast %126 : f32 to vector<1x128xf32>
    %582 = arith.mulf %239, %581 : vector<1x128xf32>
    %583 = arith.addf %580, %582 : vector<1x128xf32>
    %584 = vector.broadcast %127 : f32 to vector<1x128xf32>
    %585 = arith.mulf %248, %584 : vector<1x128xf32>
    %586 = arith.addf %583, %585 : vector<1x128xf32>
    %587 = vector.broadcast %128 : f32 to vector<1x128xf32>
    %588 = arith.mulf %257, %587 : vector<1x128xf32>
    %589 = arith.addf %586, %588 : vector<1x128xf32>
    %590 = vector.broadcast %129 : f32 to vector<1x128xf32>
    %591 = arith.mulf %266, %590 : vector<1x128xf32>
    %592 = arith.addf %589, %591 : vector<1x128xf32>
    %593 = vector.broadcast %139 : f32 to vector<1x128xf32>
    %594 = arith.addf %592, %593 : vector<1x128xf32>
    %cst_24 = arith.constant 0.000000e+00 : f32
    %595 = vector.broadcast %cst_24 : f32 to vector<1x128xf32>
    %596 = arith.maximumf %594, %595 : vector<1x128xf32>
    %597 = vector.broadcast %140 : f32 to vector<1x128xf32>
    %598 = arith.mulf %299, %597 : vector<1x128xf32>
    %599 = vector.broadcast %141 : f32 to vector<1x128xf32>
    %600 = arith.mulf %332, %599 : vector<1x128xf32>
    %601 = arith.addf %598, %600 : vector<1x128xf32>
    %602 = vector.broadcast %142 : f32 to vector<1x128xf32>
    %603 = arith.mulf %365, %602 : vector<1x128xf32>
    %604 = arith.addf %601, %603 : vector<1x128xf32>
    %605 = vector.broadcast %143 : f32 to vector<1x128xf32>
    %606 = arith.mulf %398, %605 : vector<1x128xf32>
    %607 = arith.addf %604, %606 : vector<1x128xf32>
    %608 = vector.broadcast %144 : f32 to vector<1x128xf32>
    %609 = arith.mulf %431, %608 : vector<1x128xf32>
    %610 = arith.addf %607, %609 : vector<1x128xf32>
    %611 = vector.broadcast %145 : f32 to vector<1x128xf32>
    %612 = arith.mulf %464, %611 : vector<1x128xf32>
    %613 = arith.addf %610, %612 : vector<1x128xf32>
    %614 = vector.broadcast %146 : f32 to vector<1x128xf32>
    %615 = arith.mulf %497, %614 : vector<1x128xf32>
    %616 = arith.addf %613, %615 : vector<1x128xf32>
    %617 = vector.broadcast %147 : f32 to vector<1x128xf32>
    %618 = arith.mulf %530, %617 : vector<1x128xf32>
    %619 = arith.addf %616, %618 : vector<1x128xf32>
    %620 = vector.broadcast %148 : f32 to vector<1x128xf32>
    %621 = arith.mulf %563, %620 : vector<1x128xf32>
    %622 = arith.addf %619, %621 : vector<1x128xf32>
    %623 = vector.broadcast %149 : f32 to vector<1x128xf32>
    %624 = arith.mulf %596, %623 : vector<1x128xf32>
    %625 = arith.addf %622, %624 : vector<1x128xf32>
    %626 = vector.broadcast %170 : f32 to vector<1x128xf32>
    %627 = arith.addf %625, %626 : vector<1x128xf32>
    %c0_25 = arith.constant 0 : index
    %c0_26 = arith.constant 0 : index
    %c0_27 = arith.constant 0 : index
    %628 = vector.load %arg3[%c0_25, %c0_26, %c0_27] : memref<3x1x128xf32, #tpu.memory_space<vmem>>, vector<1x1x128xf32>
    %629 = vector.shape_cast %628 : vector<1x1x128xf32> to vector<1x128xf32>
    %630 = vector.shape_cast %627 : vector<1x128xf32> to vector<1x1x128xf32>
    tpu.vector_store %arg3[%c0_25, %c0_26, %c0_27], %630 {strides = array<i32>} : memref<3x1x128xf32, #tpu.memory_space<vmem>>, vector<1x1x128xf32>,
    %631 = vector.broadcast %150 : f32 to vector<1x128xf32>
    %632 = arith.mulf %299, %631 : vector<1x128xf32>
    %633 = vector.broadcast %151 : f32 to vector<1x128xf32>
    %634 = arith.mulf %332, %633 : vector<1x128xf32>
    %635 = arith.addf %632, %634 : vector<1x128xf32>
    %636 = vector.broadcast %152 : f32 to vector<1x128xf32>
    %637 = arith.mulf %365, %636 : vector<1x128xf32>
    %638 = arith.addf %635, %637 : vector<1x128xf32>
    %639 = vector.broadcast %153 : f32 to vector<1x128xf32>
    %640 = arith.mulf %398, %639 : vector<1x128xf32>
    %641 = arith.addf %638, %640 : vector<1x128xf32>
    %642 = vector.broadcast %154 : f32 to vector<1x128xf32>
    %643 = arith.mulf %431, %642 : vector<1x128xf32>
    %644 = arith.addf %641, %643 : vector<1x128xf32>
    %645 = vector.broadcast %155 : f32 to vector<1x128xf32>
    %646 = arith.mulf %464, %645 : vector<1x128xf32>
    %647 = arith.addf %644, %646 : vector<1x128xf32>
    %648 = vector.broadcast %156 : f32 to vector<1x128xf32>
    %649 = arith.mulf %497, %648 : vector<1x128xf32>
    %650 = arith.addf %647, %649 : vector<1x128xf32>
    %651 = vector.broadcast %157 : f32 to vector<1x128xf32>
    %652 = arith.mulf %530, %651 : vector<1x128xf32>
    %653 = arith.addf %650, %652 : vector<1x128xf32>
    %654 = vector.broadcast %158 : f32 to vector<1x128xf32>
    %655 = arith.mulf %563, %654 : vector<1x128xf32>
    %656 = arith.addf %653, %655 : vector<1x128xf32>
    %657 = vector.broadcast %159 : f32 to vector<1x128xf32>
    %658 = arith.mulf %596, %657 : vector<1x128xf32>
    %659 = arith.addf %656, %658 : vector<1x128xf32>
    %660 = vector.broadcast %171 : f32 to vector<1x128xf32>
    %661 = arith.addf %659, %660 : vector<1x128xf32>
    %c1_28 = arith.constant 1 : index
    %c0_29 = arith.constant 0 : index
    %c0_30 = arith.constant 0 : index
    %662 = vector.load %arg3[%c1_28, %c0_29, %c0_30] : memref<3x1x128xf32, #tpu.memory_space<vmem>>, vector<1x1x128xf32>
    %663 = vector.shape_cast %662 : vector<1x1x128xf32> to vector<1x128xf32>
    %664 = vector.shape_cast %661 : vector<1x128xf32> to vector<1x1x128xf32>
    tpu.vector_store %arg3[%c1_28, %c0_29, %c0_30], %664 {strides = array<i32>} : memref<3x1x128xf32, #tpu.memory_space<vmem>>, vector<1x1x128xf32>,
    %665 = vector.broadcast %160 : f32 to vector<1x128xf32>
    %666 = arith.mulf %299, %665 : vector<1x128xf32>
    %667 = vector.broadcast %161 : f32 to vector<1x128xf32>
    %668 = arith.mulf %332, %667 : vector<1x128xf32>
    %669 = arith.addf %666, %668 : vector<1x128xf32>
    %670 = vector.broadcast %162 : f32 to vector<1x128xf32>
    %671 = arith.mulf %365, %670 : vector<1x128xf32>
    %672 = arith.addf %669, %671 : vector<1x128xf32>
    %673 = vector.broadcast %163 : f32 to vector<1x128xf32>
    %674 = arith.mulf %398, %673 : vector<1x128xf32>
    %675 = arith.addf %672, %674 : vector<1x128xf32>
    %676 = vector.broadcast %164 : f32 to vector<1x128xf32>
    %677 = arith.mulf %431, %676 : vector<1x128xf32>
    %678 = arith.addf %675, %677 : vector<1x128xf32>
    %679 = vector.broadcast %165 : f32 to vector<1x128xf32>
    %680 = arith.mulf %464, %679 : vector<1x128xf32>
    %681 = arith.addf %678, %680 : vector<1x128xf32>
    %682 = vector.broadcast %166 : f32 to vector<1x128xf32>
    %683 = arith.mulf %497, %682 : vector<1x128xf32>
    %684 = arith.addf %681, %683 : vector<1x128xf32>
    %685 = vector.broadcast %167 : f32 to vector<1x128xf32>
    %686 = arith.mulf %530, %685 : vector<1x128xf32>
    %687 = arith.addf %684, %686 : vector<1x128xf32>
    %688 = vector.broadcast %168 : f32 to vector<1x128xf32>
    %689 = arith.mulf %563, %688 : vector<1x128xf32>
    %690 = arith.addf %687, %689 : vector<1x128xf32>
    %691 = vector.broadcast %169 : f32 to vector<1x128xf32>
    %692 = arith.mulf %596, %691 : vector<1x128xf32>
    %693 = arith.addf %690, %692 : vector<1x128xf32>
    %694 = vector.broadcast %172 : f32 to vector<1x128xf32>
    %695 = arith.addf %693, %694 : vector<1x128xf32>
    %c2_31 = arith.constant 2 : index
    %c0_32 = arith.constant 0 : index
    %c0_33 = arith.constant 0 : index
    %696 = vector.load %arg3[%c2_31, %c0_32, %c0_33] : memref<3x1x128xf32, #tpu.memory_space<vmem>>, vector<1x1x128xf32>
    %697 = vector.shape_cast %696 : vector<1x1x128xf32> to vector<1x128xf32>
    %698 = vector.shape_cast %695 : vector<1x128xf32> to vector<1x1x128xf32>
    tpu.vector_store %arg3[%c2_31, %c0_32, %c0_33], %698 {strides = array<i32>} : memref<3x1x128xf32, #tpu.memory_space<vmem>>, vector<1x1x128xf32>,
    return
  }
  func.func @transform_0(%arg0: i32) -> i32 {
    %c0_i32 = arith.constant 0 : i32
    %c0_i32_0 = arith.constant 0 : i32
    return %c0_i32 : i32
  }
  func.func @transform_1(%arg0: i32) -> (i32, i32, i32) {
    %c0_i32 = arith.constant 0 : i32
    %c0_i32_0 = arith.constant 0 : i32
    %c0_i32_1 = arith.constant 0 : i32
    return %c0_i32, %arg0, %c0_i32_0 : i32, i32, i32
  }
  func.func @transform_2(%arg0: i32) -> (i32, i32, i32) {
    %c0_i32 = arith.constant 0 : i32
    %c0_i32_0 = arith.constant 0 : i32
    %c0_i32_1 = arith.constant 0 : i32
    return %c0_i32, %arg0, %c0_i32_0 : i32, i32, i32
  }
}

</mosaic_0001>

<llo_original>
// kernel: spiral_forward_planes.1
$region0: #{spiral_forward_planes.1}
  #allocation0 [shape = 'u32[]', space=smem, size = 0x4, offset = 0x4, fixed_abs, tag = 'smem constant byte address 0x4 - core index']
  #allocation1 [shape = 'u32[144,128]{1,0:T(1,128)}', space=vmem, size = 0x12000, scoped, tag = 'internal scratch']
  %s0 = inlined_call_operand.hbm [shape: f32[256], index: 0, kind: input, shape index: {}]
  %s1 = inlined_call_operand.hbm [shape: f32[2,1,128], index: 1, kind: input, shape index: {}]
  %s2 = inlined_call_operand.hbm [shape: f32[3,1,128], index: 2, kind: output, shape index: {}]
  %s3 = sld [smem:[#allocation0]]
  $region26: #{spiral_forward_planes.1} parent=0
    _
  %s5 = ssub.s32 1, %s3
  %s6 = scalar_select 0, %s5, %s3
  $region1: #{spiral_forward_planes.1} parent=0
    #allocation2 [shape = 'u8[1024]{0}', space=smem, size = 0x400, scoped, tag = 'input window, operand 0, single buffered']
    #allocation3 [shape = 's32[1]{0}', space=sflag, size = 0x4, scoped, tag = 'scoped memory for spiral_forward_planes.1']
    #allocation4 [shape = 's32[1]{0}', space=sflag, size = 0x4, scoped, tag = 'scoped memory for spiral_forward_planes.1']
    #allocation5 [shape = 's32[1]{0}', space=sflag, size = 0x4, scoped, tag = 'scoped memory for spiral_forward_planes.1']
    #allocation6 [shape = 'u8[1024]{0}', space=vmem, size = 0x400, scoped, tag = 'input window, operand 1, single buffered']
    #allocation7 [shape = 'u8[1536]{0}', space=vmem, size = 0x800, scoped, tag = 'output window, operand 0, single buffered']
    %7 = vsyncpa [#allocation5], 0
    %8 = vsyncpa [#allocation3], 0
    %9 = vsyncpa [#allocation4], 0
    // Predicated region
    $region2: #{spiral_forward_planes.1} parent=1 // pred_check
      _
    $region3: #{spiral_forward_planes.1} parent=1 // pred_check_branch
      %11 = sbr.rel (0) target = $region5
    $region4: #{spiral_forward_planes.1} parent=1 // pred_region
      %s13 = ssub.s32 32, 32
      %14 = vsyncadd [#allocation5], %s13
      %17 = dma.hbm_to_smem %s0, 32, [#allocation2], [#allocation5]
    $region5: #{spiral_forward_planes.1} parent=1 // pred_fallthru
      _
    // Predicated region
    $region6: #{spiral_forward_planes.1} parent=1 // pred_check
      _
    $region7: #{spiral_forward_planes.1} parent=1 // pred_check_branch
      %19 = sbr.rel (0) target = $region9
    $region8: #{spiral_forward_planes.1} parent=1 // pred_region
      %s21 = ssub.s32 32, 32
      %22 = vsyncadd [#allocation3], %s21
      %s23 = sshll.u32 [#allocation6], 4
      %s24 = int_to_ptr.vmem [resolvable:$true] %s23
      %29 = dma.hbm_to_vmem [thread:$0]  %s1, 32, %s24, [#allocation3], 16, 16, 1
    $region9: #{spiral_forward_planes.1} parent=1 // pred_fallthru
      _
    // Predicated region
    $region10: #{spiral_forward_planes.1} parent=1 // pred_check
      _
    $region11: #{spiral_forward_planes.1} parent=1 // pred_check_branch
      %31 = sbr.rel (0) target = $region13
    $region12: #{spiral_forward_planes.1} parent=1 // pred_region
      %32 = dma.done [#allocation5], 32
    $region13: #{spiral_forward_planes.1} parent=1 // pred_fallthru
      _
    // Predicated region
    $region14: #{spiral_forward_planes.1} parent=1 // pred_check
      _
    $region15: #{spiral_forward_planes.1} parent=1 // pred_check_branch
      %34 = sbr.rel (0) target = $region17
    $region16: #{spiral_forward_planes.1} parent=1 // pred_region
      %35 = dma.done [#allocation3], 32
    $region17: #{spiral_forward_planes.1} parent=1 // pred_fallthru
      _
    %36 = sfence
    %s37 = sld [smem:[#allocation2]]
    %s38 = sld [smem:[#allocation2 + $0x1]]
    %s39 = sld [smem:[#allocation2 + $0x2]]
    %s40 = sld [smem:[#allocation2 + $0x3]]
    %s41 = sld [smem:[#allocation2 + $0x4]]
    %s42 = sld [smem:[#allocation2 + $0x5]]
    %s43 = sld [smem:[#allocation2 + $0x6]]
    %s44 = sld [smem:[#allocation2 + $0x7]]
    %s45 = sld [smem:[#allocation2 + $0x8]]
    %s46 = sld [smem:[#allocation2 + $0x9]]
    %s47 = sld [smem:[#allocation2 + $0xa]]
    %s48 = sld [smem:[#allocation2 + $0xb]]
    %s49 = sld [smem:[#allocation2 + $0xc]]
    %s50 = sld [smem:[#allocation2 + $0xd]]
    %s51 = sld [smem:[#allocation2 + $0xe]]
    %s52 = sld [smem:[#allocation2 + $0xf]]
    %s53 = sld [smem:[#allocation2 + $0x10]]
    %s54 = sld [smem:[#allocation2 + $0x11]]
    %s55 = sld [smem:[#allocation2 + $0x12]]
    %s56 = sld [smem:[#allocation2 + $0x13]]
    %s57 = sld [smem:[#allocation2 + $0x14]]
    %s58 = sld [smem:[#allocation2 + $0x15]]
    %s59 = sld [smem:[#allocation2 + $0x16]]
    %s60 = sld [smem:[#allocation2 + $0x17]]
    %s61 = sld [smem:[#allocation2 + $0x18]]
    %s62 = sld [smem:[#allocation2 + $0x19]]
    %s63 = sld [smem:[#allocation2 + $0x1a]]
    %s64 = sld [smem:[#allocation2 + $0x1b]]
    %s65 = sld [smem:[#allocation2 + $0x1c]]
    %s66 = sld [smem:[#allocation2 + $0x1d]]
    %s67 = sld [smem:[#allocation2 + $0x1e]]
    %s68 = sld [smem:[#allocation2 + $0x1f]]
    %s69 = sld [smem:[#allocation2 + $0x20]]
    %s70 = sld [smem:[#allocation2 + $0x21]]
    %s71 = sld [smem:[#allocation2 + $0x22]]
    %s72 = sld [smem:[#allocation2 + $0x23]]
    %s73 = sld [smem:[#allocation2 + $0x24]]
    %s74 = sld [smem:[#allocation2 + $0x25]]
    %s75 = sld [smem:[#allocation2 + $0x26]]
    %s76 = sld [smem:[#allocation2 + $0x27]]
    %s77 = sld [smem:[#allocation2 + $0x28]]
    %s78 = sld [smem:[#allocation2 + $0x29]]
    %s79 = sld [smem:[#allocation2 + $0x2a]]
    %s80 = sld [smem:[#allocation2 + $0x2b]]
    %s81 = sld [smem:[#allocation2 + $0x2c]]
    %s82 = sld [smem:[#allocation2 + $0x2d]]
    %s83 = sld [smem:[#allocation2 + $0x2e]]
    %s84 = sld [smem:[#allocation2 + $0x2f]]
    %s85 = sld [smem:[#allocation2 + $0x30]]
    %s86 = sld [smem:[#allocation2 + $0x31]]
    %s87 = sld [smem:[#allocation2 + $0x32]]
    %s88 = sld [smem:[#allocation2 + $0x33]]
    %s89 = sld [smem:[#allocation2 + $0x34]]
    %s90 = sld [smem:[#allocation2 + $0x35]]
    %s91 = sld [smem:[#allocation2 + $0x36]]
    %s92 = sld [smem:[#allocation2 + $0x37]]
    %s93 = sld [smem:[#allocation2 + $0x38]]
    %s94 = sld [smem:[#allocation2 + $0x39]]
    %s95 = sld [smem:[#allocation2 + $0x3a]]
    %s96 = sld [smem:[#allocation2 + $0x3b]]
    %s97 = sld [smem:[#allocation2 + $0x3c]]
    %s98 = sld [smem:[#allocation2 + $0x3d]]
    %s99 = sld [smem:[#allocation2 + $0x3e]]
    %s100 = sld [smem:[#allocation2 + $0x3f]]
    %s101 = sld [smem:[#allocation2 + $0x40]]
    %s102 = sld [smem:[#allocation2 + $0x41]]
    %s103 = sld [smem:[#allocation2 + $0x42]]
    %s104 = sld [smem:[#allocation2 + $0x43]]
    %s105 = sld [smem:[#allocation2 + $0x44]]
    %s106 = sld [smem:[#allocation2 + $0x45]]
    %s107 = sld [smem:[#allocation2 + $0x46]]
    %s108 = sld [smem:[#allocation2 + $0x47]]
    %s109 = sld [smem:[#allocation2 + $0x48]]
    %s110 = sld [smem:[#allocation2 + $0x49]]
    %s111 = sld [smem:[#allocation2 + $0x4a]]
    %s112 = sld [smem:[#allocation2 + $0x4b]]
    %s113 = sld [smem:[#allocation2 + $0x4c]]
    %s114 = sld [smem:[#allocation2 + $0x4d]]
    %s115 = sld [smem:[#allocation2 + $0x4e]]
    %s116 = sld [smem:[#allocation2 + $0x4f]]
    %s117 = sld [smem:[#allocation2 + $0x50]]
    %s118 = sld [smem:[#allocation2 + $0x51]]
    %s119 = sld [smem:[#allocation2 + $0x52]]
    %s120 = sld [smem:[#allocation2 + $0x53]]
    %s121 = sld [smem:[#allocation2 + $0x54]]
    %s122 = sld [smem:[#allocation2 + $0x55]]
    %s123 = sld [smem:[#allocation2 + $0x56]]
    %s124 = sld [smem:[#allocation2 + $0x57]]
    %s125 = sld [smem:[#allocation2 + $0x58]]
    %s126 = sld [smem:[#allocation2 + $0x59]]
    %s127 = sld [smem:[#allocation2 + $0x5a]]
    %s128 = sld [smem:[#allocation2 + $0x5b]]
    %s129 = sld [smem:[#allocation2 + $0x5c]]
    %s130 = sld [smem:[#allocation2 + $0x5d]]
    %s131 = sld [smem:[#allocation2 + $0x5e]]
    %s132 = sld [smem:[#allocation2 + $0x5f]]
    %s133 = sld [smem:[#allocation2 + $0x60]]
    %s134 = sld [smem:[#allocation2 + $0x61]]
    %s135 = sld [smem:[#allocation2 + $0x62]]
    %s136 = sld [smem:[#allocation2 + $0x63]]
    %s137 = sld [smem:[#allocation2 + $0x64]]
    %s138 = sld [smem:[#allocation2 + $0x65]]
    %s139 = sld [smem:[#allocation2 + $0x66]]
    %s140 = sld [smem:[#allocation2 + $0x67]]
    %s141 = sld [smem:[#allocation2 + $0x68]]
    %s142 = sld [smem:[#allocation2 + $0x69]]
    %s143 = sld [smem:[#allocation2 + $0x6a]]
    %s144 = sld [smem:[#allocation2 + $0x6b]]
    %s145 = sld [smem:[#allocation2 + $0x6c]]
    %s146 = sld [smem:[#allocation2 + $0x6d]]
    %s147 = sld [smem:[#allocation2 + $0x6e]]
    %s148 = sld [smem:[#allocation2 + $0x6f]]
    %s149 = sld [smem:[#allocation2 + $0x70]]
    %s150 = sld [smem:[#allocation2 + $0x71]]
    %s151 = sld [smem:[#allocation2 + $0x72]]
    %s152 = sld [smem:[#allocation2 + $0x73]]
    %s153 = sld [smem:[#allocation2 + $0x74]]
    %s154 = sld [smem:[#allocation2 + $0x75]]
    %s155 = sld [smem:[#allocation2 + $0x76]]
    %s156 = sld [smem:[#allocation2 + $0x77]]
    %s157 = sld [smem:[#allocation2 + $0x78]]
    %s158 = sld [smem:[#allocation2 + $0x79]]
    %s159 = sld [smem:[#allocation2 + $0x7a]]
    %s160 = sld [smem:[#allocation2 + $0x7b]]
    %s161 = sld [smem:[#allocation2 + $0x7c]]
    %s162 = sld [smem:[#allocation2 + $0x7d]]
    %s163 = sld [smem:[#allocation2 + $0x7e]]
    %s164 = sld [smem:[#allocation2 + $0x7f]]
    %s165 = sld [smem:[#allocation2 + $0x80]]
    %s166 = sld [smem:[#allocation2 + $0x81]]
    %s167 = sld [smem:[#allocation2 + $0x82]]
    %s168 = sld [smem:[#allocation2 + $0x83]]
    %s169 = sld [smem:[#allocation2 + $0x84]]
    %s170 = sld [smem:[#allocation2 + $0x85]]
    %s171 = sld [smem:[#allocation2 + $0x86]]
    %s172 = sld [smem:[#allocation2 + $0x87]]
    %s173 = sld [smem:[#allocation2 + $0x88]]
    %s174 = sld [smem:[#allocation2 + $0x89]]
    %s175 = sld [smem:[#allocation2 + $0x8a]]
    %s176 = sld [smem:[#allocation2 + $0x8b]]
    %s177 = sld [smem:[#allocation2 + $0x8c]]
    %s178 = sld [smem:[#allocation2 + $0x8d]]
    %s179 = sld [smem:[#allocation2 + $0x8e]]
    %s180 = sld [smem:[#allocation2 + $0x8f]]
    %s181 = sld [smem:[#allocation2 + $0x90]]
    %s182 = sld [smem:[#allocation2 + $0x91]]
    %s183 = sld [smem:[#allocation2 + $0x92]]
    %s184 = sld [smem:[#allocation2 + $0x93]]
    %s185 = sld [smem:[#allocation2 + $0x94]]
    %s186 = sld [smem:[#allocation2 + $0x95]]
    %s187 = sld [smem:[#allocation2 + $0x96]]
    %s188 = sld [smem:[#allocation2 + $0x97]]
    %s189 = sld [smem:[#allocation2 + $0x98]]
    %s190 = sld [smem:[#allocation2 + $0x99]]
    %s191 = sld [smem:[#allocation2 + $0x9a]]
    %s192 = sld [smem:[#allocation2 + $0x9b]]
    %s193 = sld [smem:[#allocation2 + $0x9c]]
    %s194 = sld [smem:[#allocation2 + $0x9d]]
    %s195 = sld [smem:[#allocation2 + $0x9e]]
    %s196 = sld [smem:[#allocation2 + $0x9f]]
    %s197 = sld [smem:[#allocation2 + $0xa0]]
    %s198 = sld [smem:[#allocation2 + $0xa1]]
    %s199 = sld [smem:[#allocation2 + $0xa2]]
    %s200 = sld [smem:[#allocation2 + $0xa3]]
    %s201 = sld [smem:[#allocation2 + $0xa4]]
    %s202 = sld [smem:[#allocation2 + $0xa5]]
    %s203 = sld [smem:[#allocation2 + $0xa6]]
    %s204 = sld [smem:[#allocation2 + $0xa7]]
    %s205 = sld [smem:[#allocation2 + $0xa8]]
    %s206 = sld [smem:[#allocation2 + $0xa9]]
    %s207 = sld [smem:[#allocation2 + $0xaa]]
    %s208 = sld [smem:[#allocation2 + $0xab]]
    %s209 = sld [smem:[#allocation2 + $0xac]]
    %v210 = vld [vmem:[#allocation6] sm:$0x1]
    %s211 = scalar_lea.vmem [#allocation6], 1
    %v212 = vld [vmem:[%s211] sm:$0x1]
    %v213 = vstv %s37
    %v214 = vmul.f32 %v210, %v213
    %v215 = vstv %s38
    %v216 = vmul.f32 %v212, %v215
    %v217 = vadd.f32 %v214, %v216
    %v218 = vstv %s57
    %v219 = vadd.f32 %v217, %v218
    %v220 = vmax.f32 %v219, 0.0
    %v221 = vstv %s39
    %v222 = vmul.f32 %v210, %v221
    %v223 = vstv %s40
    %v224 = vmul.f32 %v212, %v223
    %v225 = vadd.f32 %v222, %v224
    %v226 = vstv %s58
    %v227 = vadd.f32 %v225, %v226
    %v228 = vmax.f32 %v227, 0.0
    %v229 = vstv %s41
    %v230 = vmul.f32 %v210, %v229
    %v231 = vstv %s42
    %v232 = vmul.f32 %v212, %v231
    %v233 = vadd.f32 %v230, %v232
    %v234 = vstv %s59
    %v235 = vadd.f32 %v233, %v234
    %v236 = vmax.f32 %v235, 0.0
    %v237 = vstv %s43
    %v238 = vmul.f32 %v210, %v237
    %v239 = vstv %s44
    %v240 = vmul.f32 %v212, %v239
    %v241 = vadd.f32 %v238, %v240
    %v242 = vstv %s60
    %v243 = vadd.f32 %v241, %v242
    %v244 = vmax.f32 %v243, 0.0
    %v245 = vstv %s45
    %v246 = vmul.f32 %v210, %v245
    %v247 = vstv %s46
    %v248 = vmul.f32 %v212, %v247
    %v249 = vadd.f32 %v246, %v248
    %v250 = vstv %s61
    %v251 = vadd.f32 %v249, %v250
    %v252 = vmax.f32 %v251, 0.0
    %v253 = vstv %s47
    %v254 = vmul.f32 %v210, %v253
    %v255 = vstv %s48
    %v256 = vmul.f32 %v212, %v255
    %v257 = vadd.f32 %v254, %v256
    %v258 = vstv %s62
    %v259 = vadd.f32 %v257, %v258
    %v260 = vmax.f32 %v259, 0.0
    %v261 = vstv %s49
    %v262 = vmul.f32 %v210, %v261
    %v263 = vstv %s50
    %v264 = vmul.f32 %v212, %v263
    %v265 = vadd.f32 %v262, %v264
    %v266 = vstv %s63
    %v267 = vadd.f32 %v265, %v266
    %v268 = vmax.f32 %v267, 0.0
    %v269 = vstv %s51
    %v270 = vmul.f32 %v210, %v269
    %v271 = vstv %s52
    %v272 = vmul.f32 %v212, %v271
    %v273 = vadd.f32 %v270, %v272
    %v274 = vstv %s64
    %v275 = vadd.f32 %v273, %v274
    %v276 = vmax.f32 %v275, 0.0
    %v277 = vstv %s53
    %v278 = vmul.f32 %v210, %v277
    %v279 = vstv %s54
    %v280 = vmul.f32 %v212, %v279
    %v281 = vadd.f32 %v278, %v280
    %v282 = vstv %s65
    %v283 = vadd.f32 %v281, %v282
    %v284 = vmax.f32 %v283, 0.0
    %v285 = vstv %s55
    %v286 = vmul.f32 %v210, %v285
    %v287 = vstv %s56
    %v288 = vmul.f32 %v212, %v287
    %v289 = vadd.f32 %v286, %v288
    %v290 = vstv %s66
    %v291 = vadd.f32 %v289, %v290
    %v292 = vmax.f32 %v291, 0.0
    %v293 = vstv %s67
    %v294 = vmul.f32 %v220, %v293
    %v295 = vstv %s68
    %v296 = vmul.f32 %v228, %v295
    %v297 = vadd.f32 %v294, %v296
    %v298 = vstv %s69
    %v299 = vmul.f32 %v236, %v298
    %v300 = vadd.f32 %v297, %v299
    %v301 = vstv %s70
    %v302 = vmul.f32 %v244, %v301
    %v303 = vadd.f32 %v300, %v302
    %v304 = vstv %s71
    %v305 = vmul.f32 %v252, %v304
    %v306 = vadd.f32 %v303, %v305
    %v307 = vstv %s72
    %v308 = vmul.f32 %v260, %v307
    %v309 = vadd.f32 %v306, %v308
    %v310 = vstv %s73
    %v311 = vmul.f32 %v268, %v310
    %v312 = vadd.f32 %v309, %v311
    %v313 = vstv %s74
    %v314 = vmul.f32 %v276, %v313
    %v315 = vadd.f32 %v312, %v314
    %v316 = vstv %s75
    %v317 = vmul.f32 %v284, %v316
    %v318 = vadd.f32 %v315, %v317
    %v319 = vstv %s76
    %v320 = vmul.f32 %v292, %v319
    %v321 = vadd.f32 %v318, %v320
    %v322 = vstv %s167
    %v323 = vadd.f32 %v321, %v322
    %v324 = vmax.f32 %v323, 0.0
    %v325 = vstv %s77
    %v326 = vmul.f32 %v220, %v325
    %v327 = vstv %s78
    %v328 = vmul.f32 %v228, %v327
    %v329 = vadd.f32 %v326, %v328
    %v330 = vstv %s79
    %v331 = vmul.f32 %v236, %v330
    %v332 = vadd.f32 %v329, %v331
    %v333 = vstv %s80
    %v334 = vmul.f32 %v244, %v333
    %v335 = vadd.f32 %v332, %v334
    %v336 = vstv %s81
    %v337 = vmul.f32 %v252, %v336
    %v338 = vadd.f32 %v335, %v337
    %v339 = vstv %s82
    %v340 = vmul.f32 %v260, %v339
    %v341 = vadd.f32 %v338, %v340
    %v342 = vstv %s83
    %v343 = vmul.f32 %v268, %v342
    %v344 = vadd.f32 %v341, %v343
    %v345 = vstv %s84
    %v346 = vmul.f32 %v276, %v345
    %v347 = vadd.f32 %v344, %v346
    %v348 = vstv %s85
    %v349 = vmul.f32 %v284, %v348
    %v350 = vadd.f32 %v347, %v349
    %v351 = vstv %s86
    %v352 = vmul.f32 %v292, %v351
    %v353 = vadd.f32 %v350, %v352
    %v354 = vstv %s168
    %v355 = vadd.f32 %v353, %v354
    %v356 = vmax.f32 %v355, 0.0
    %v357 = vstv %s87
    %v358 = vmul.f32 %v220, %v357
    %v359 = vstv %s88
    %v360 = vmul.f32 %v228, %v359
    %v361 = vadd.f32 %v358, %v360
    %v362 = vstv %s89
    %v363 = vmul.f32 %v236, %v362
    %v364 = vadd.f32 %v361, %v363
    %v365 = vstv %s90
    %v366 = vmul.f32 %v244, %v365
    %v367 = vadd.f32 %v364, %v366
    %v368 = vstv %s91
    %v369 = vmul.f32 %v252, %v368
    %v370 = vadd.f32 %v367, %v369
    %v371 = vstv %s92
    %v372 = vmul.f32 %v260, %v371
    %v373 = vadd.f32 %v370, %v372
    %v374 = vstv %s93
    %v375 = vmul.f32 %v268, %v374
    %v376 = vadd.f32 %v373, %v375
    %v377 = vstv %s94
    %v378 = vmul.f32 %v276, %v377
    %v379 = vadd.f32 %v376, %v378
    %v380 = vstv %s95
    %v381 = vmul.f32 %v284, %v380
    %v382 = vadd.f32 %v379, %v381
    %v383 = vstv %s96
    %v384 = vmul.f32 %v292, %v383
    %v385 = vadd.f32 %v382, %v384
    %v386 = vstv %s169
    %v387 = vadd.f32 %v385, %v386
    %v388 = vmax.f32 %v387, 0.0
    %v389 = vstv %s97
    %v390 = vmul.f32 %v220, %v389
    %v391 = vstv %s98
    %v392 = vmul.f32 %v228, %v391
    %v393 = vadd.f32 %v390, %v392
    %v394 = vstv %s99
    %v395 = vmul.f32 %v236, %v394
    %v396 = vadd.f32 %v393, %v395
    %v397 = vstv %s100
    %v398 = vmul.f32 %v244, %v397
    %v399 = vadd.f32 %v396, %v398
    %v400 = vstv %s101
    %v401 = vmul.f32 %v252, %v400
    %v402 = vadd.f32 %v399, %v401
    %v403 = vstv %s102
    %v404 = vmul.f32 %v260, %v403
    %v405 = vadd.f32 %v402, %v404
    %v406 = vstv %s103
    %v407 = vmul.f32 %v268, %v406
    %v408 = vadd.f32 %v405, %v407
    %v409 = vstv %s104
    %v410 = vmul.f32 %v276, %v409
    %v411 = vadd.f32 %v408, %v410
    %v412 = vstv %s105
    %v413 = vmul.f32 %v284, %v412
    %v414 = vadd.f32 %v411, %v413
    %v415 = vstv %s106
    %v416 = vmul.f32 %v292, %v415
    %v417 = vadd.f32 %v414, %v416
    %v418 = vstv %s170
    %v419 = vadd.f32 %v417, %v418
    %v420 = vmax.f32 %v419, 0.0
    %v421 = vstv %s107
    %v422 = vmul.f32 %v220, %v421
    %v423 = vstv %s108
    %v424 = vmul.f32 %v228, %v423
    %v425 = vadd.f32 %v422, %v424
    %v426 = vstv %s109
    %v427 = vmul.f32 %v236, %v426
    %v428 = vadd.f32 %v425, %v427
    %v429 = vstv %s110
    %v430 = vmul.f32 %v244, %v429
    %v431 = vadd.f32 %v428, %v430
    %v432 = vstv %s111
    %v433 = vmul.f32 %v252, %v432
    %v434 = vadd.f32 %v431, %v433
    %v435 = vstv %s112
    %v436 = vmul.f32 %v260, %v435
    %v437 = vadd.f32 %v434, %v436
    %v438 = vstv %s113
    %v439 = vmul.f32 %v268, %v438
    %v440 = vadd.f32 %v437, %v439
    %v441 = vstv %s114
    %v442 = vmul.f32 %v276, %v441
    %v443 = vadd.f32 %v440, %v442
    %v444 = vstv %s115
    %v445 = vmul.f32 %v284, %v444
    %v446 = vadd.f32 %v443, %v445
    %v447 = vstv %s116
    %v448 = vmul.f32 %v292, %v447
    %v449 = vadd.f32 %v446, %v448
    %v450 = vstv %s171
    %v451 = vadd.f32 %v449, %v450
    %v452 = vmax.f32 %v451, 0.0
    %v453 = vstv %s117
    %v454 = vmul.f32 %v220, %v453
    %v455 = vstv %s118
    %v456 = vmul.f32 %v228, %v455
    %v457 = vadd.f32 %v454, %v456
    %v458 = vstv %s119
    %v459 = vmul.f32 %v236, %v458
    %v460 = vadd.f32 %v457, %v459
    %v461 = vstv %s120
    %v462 = vmul.f32 %v244, %v461
    %v463 = vadd.f32 %v460, %v462
    %v464 = vstv %s121
    %v465 = vmul.f32 %v252, %v464
    %v466 = vadd.f32 %v463, %v465
    %v467 = vstv %s122
    %v468 = vmul.f32 %v260, %v467
    %v469 = vadd.f32 %v466, %v468
    %v470 = vstv %s123
    %v471 = vmul.f32 %v268, %v470
    %v472 = vadd.f32 %v469, %v471
    %v473 = vstv %s124
    %v474 = vmul.f32 %v276, %v473
    %v475 = vadd.f32 %v472, %v474
    %v476 = vstv %s125
    %v477 = vmul.f32 %v284, %v476
    %v478 = vadd.f32 %v475, %v477
    %v479 = vstv %s126
    %v480 = vmul.f32 %v292, %v479
    %v481 = vadd.f32 %v478, %v480
    %v482 = vstv %s172
    %v483 = vadd.f32 %v481, %v482
    %v484 = vmax.f32 %v483, 0.0
    %v485 = vstv %s127
    %v486 = vmul.f32 %v220, %v485
    %v487 = vstv %s128
    %v488 = vmul.f32 %v228, %v487
    %v489 = vadd.f32 %v486, %v488
    %v490 = vstv %s129
    %v491 = vmul.f32 %v236, %v490
    %v492 = vadd.f32 %v489, %v491
    %v493 = vstv %s130
    %v494 = vmul.f32 %v244, %v493
    %v495 = vadd.f32 %v492, %v494
    %v496 = vstv %s131
    %v497 = vmul.f32 %v252, %v496
    %v498 = vadd.f32 %v495, %v497
    %v499 = vstv %s132
    %v500 = vmul.f32 %v260, %v499
    %v501 = vadd.f32 %v498, %v500
    %v502 = vstv %s133
    %v503 = vmul.f32 %v268, %v502
    %v504 = vadd.f32 %v501, %v503
    %v505 = vstv %s134
    %v506 = vmul.f32 %v276, %v505
    %v507 = vadd.f32 %v504, %v506
    %v508 = vstv %s135
    %v509 = vmul.f32 %v284, %v508
    %v510 = vadd.f32 %v507, %v509
    %v511 = vstv %s136
    %v512 = vmul.f32 %v292, %v511
    %v513 = vadd.f32 %v510, %v512
    %v514 = vstv %s173
    %v515 = vadd.f32 %v513, %v514
    %v516 = vmax.f32 %v515, 0.0
    %v517 = vstv %s137
    %v518 = vmul.f32 %v220, %v517
    %v519 = vstv %s138
    %v520 = vmul.f32 %v228, %v519
    %v521 = vadd.f32 %v518, %v520
    %v522 = vstv %s139
    %v523 = vmul.f32 %v236, %v522
    %v524 = vadd.f32 %v521, %v523
    %v525 = vstv %s140
    %v526 = vmul.f32 %v244, %v525
    %v527 = vadd.f32 %v524, %v526
    %v528 = vstv %s141
    %v529 = vmul.f32 %v252, %v528
    %v530 = vadd.f32 %v527, %v529
    %v531 = vstv %s142
    %v532 = vmul.f32 %v260, %v531
    %v533 = vadd.f32 %v530, %v532
    %v534 = vstv %s143
    %v535 = vmul.f32 %v268, %v534
    %v536 = vadd.f32 %v533, %v535
    %v537 = vstv %s144
    %v538 = vmul.f32 %v276, %v537
    %v539 = vadd.f32 %v536, %v538
    %v540 = vstv %s145
    %v541 = vmul.f32 %v284, %v540
    %v542 = vadd.f32 %v539, %v541
    %v543 = vstv %s146
    %v544 = vmul.f32 %v292, %v543
    %v545 = vadd.f32 %v542, %v544
    %v546 = vstv %s174
    %v547 = vadd.f32 %v545, %v546
    %v548 = vmax.f32 %v547, 0.0
    %v549 = vstv %s147
    %v550 = vmul.f32 %v220, %v549
    %v551 = vstv %s148
    %v552 = vmul.f32 %v228, %v551
    %v553 = vadd.f32 %v550, %v552
    %v554 = vstv %s149
    %v555 = vmul.f32 %v236, %v554
    %v556 = vadd.f32 %v553, %v555
    %v557 = vstv %s150
    %v558 = vmul.f32 %v244, %v557
    %v559 = vadd.f32 %v556, %v558
    %v560 = vstv %s151
    %v561 = vmul.f32 %v252, %v560
    %v562 = vadd.f32 %v559, %v561
    %v563 = vstv %s152
    %v564 = vmul.f32 %v260, %v563
    %v565 = vadd.f32 %v562, %v564
    %v566 = vstv %s153
    %v567 = vmul.f32 %v268, %v566
    %v568 = vadd.f32 %v565, %v567
    %v569 = vstv %s154
    %v570 = vmul.f32 %v276, %v569
    %v571 = vadd.f32 %v568, %v570
    %v572 = vstv %s155
    %v573 = vmul.f32 %v284, %v572
    %v574 = vadd.f32 %v571, %v573
    %v575 = vstv %s156
    %v576 = vmul.f32 %v292, %v575
    %v577 = vadd.f32 %v574, %v576
    %v578 = vstv %s175
    %v579 = vadd.f32 %v577, %v578
    %v580 = vmax.f32 %v579, 0.0
    %v581 = vstv %s157
    %v582 = vmul.f32 %v220, %v581
    %v583 = vstv %s158
    %v584 = vmul.f32 %v228, %v583
    %v585 = vadd.f32 %v582, %v584
    %v586 = vstv %s159
    %v587 = vmul.f32 %v236, %v586
    %v588 = vadd.f32 %v585, %v587
    %v589 = vstv %s160
    %v590 = vmul.f32 %v244, %v589
    %v591 = vadd.f32 %v588, %v590
    %v592 = vstv %s161
    %v593 = vmul.f32 %v252, %v592
    %v594 = vadd.f32 %v591, %v593
    %v595 = vstv %s162
    %v596 = vmul.f32 %v260, %v595
    %v597 = vadd.f32 %v594, %v596
    %v598 = vstv %s163
    %v599 = vmul.f32 %v268, %v598
    %v600 = vadd.f32 %v597, %v599
    %v601 = vstv %s164
    %v602 = vmul.f32 %v276, %v601
    %v603 = vadd.f32 %v600, %v602
    %v604 = vstv %s165
    %v605 = vmul.f32 %v284, %v604
    %v606 = vadd.f32 %v603, %v605
    %v607 = vstv %s166
    %v608 = vmul.f32 %v292, %v607
    %v609 = vadd.f32 %v606, %v608
    %v610 = vstv %s176
    %v611 = vadd.f32 %v609, %v610
    %v612 = vmax.f32 %v611, 0.0
    %v613 = vstv %s177
    %v614 = vmul.f32 %v324, %v613
    %v615 = vstv %s178
    %v616 = vmul.f32 %v356, %v615
    %v617 = vadd.f32 %v614, %v616
    %v618 = vstv %s179
    %v619 = vmul.f32 %v388, %v618
    %v620 = vadd.f32 %v617, %v619
    %v621 = vstv %s180
    %v622 = vmul.f32 %v420, %v621
    %v623 = vadd.f32 %v620, %v622
    %v624 = vstv %s181
    %v625 = vmul.f32 %v452, %v624
    %v626 = vadd.f32 %v623, %v625
    %v627 = vstv %s182
    %v628 = vmul.f32 %v484, %v627
    %v629 = vadd.f32 %v626, %v628
    %v630 = vstv %s183
    %v631 = vmul.f32 %v516, %v630
    %v632 = vadd.f32 %v629, %v631
    %v633 = vstv %s184
    %v634 = vmul.f32 %v548, %v633
    %v635 = vadd.f32 %v632, %v634
    %v636 = vstv %s185
    %v637 = vmul.f32 %v580, %v636
    %v638 = vadd.f32 %v635, %v637
    %v639 = vstv %s186
    %v640 = vmul.f32 %v612, %v639
    %v641 = vadd.f32 %v638, %v640
    %v642 = vstv %s207
    %v643 = vadd.f32 %v641, %v642
    %644 = vst [vmem:[#allocation7] sm:$0x1] %v643
    %v645 = vstv %s187
    %v646 = vmul.f32 %v324, %v645
    %v647 = vstv %s188
    %v648 = vmul.f32 %v356, %v647
    %v649 = vadd.f32 %v646, %v648
    %v650 = vstv %s189
    %v651 = vmul.f32 %v388, %v650
    %v652 = vadd.f32 %v649, %v651
    %v653 = vstv %s190
    %v654 = vmul.f32 %v420, %v653
    %v655 = vadd.f32 %v652, %v654
    %v656 = vstv %s191
    %v657 = vmul.f32 %v452, %v656
    %v658 = vadd.f32 %v655, %v657
    %v659 = vstv %s192
    %v660 = vmul.f32 %v484, %v659
    %v661 = vadd.f32 %v658, %v660
    %v662 = vstv %s193
    %v663 = vmul.f32 %v516, %v662
    %v664 = vadd.f32 %v661, %v663
    %v665 = vstv %s194
    %v666 = vmul.f32 %v548, %v665
    %v667 = vadd.f32 %v664, %v666
    %v668 = vstv %s195
    %v669 = vmul.f32 %v580, %v668
    %v670 = vadd.f32 %v667, %v669
    %v671 = vstv %s196
    %v672 = vmul.f32 %v612, %v671
    %v673 = vadd.f32 %v670, %v672
    %v674 = vstv %s208
    %v675 = vadd.f32 %v673, %v674
    %s676 = scalar_lea.vmem [#allocation7], 1
    %677 = vst [vmem:[%s676] sm:$0x1] %v675
    %v678 = vstv %s197
    %v679 = vmul.f32 %v324, %v678
    %v680 = vstv %s198
    %v681 = vmul.f32 %v356, %v680
    %v682 = vadd.f32 %v679, %v681
    %v683 = vstv %s199
    %v684 = vmul.f32 %v388, %v683
    %v685 = vadd.f32 %v682, %v684
    %v686 = vstv %s200
    %v687 = vmul.f32 %v420, %v686
    %v688 = vadd.f32 %v685, %v687
    %v689 = vstv %s201
    %v690 = vmul.f32 %v452, %v689
    %v691 = vadd.f32 %v688, %v690
    %v692 = vstv %s202
    %v693 = vmul.f32 %v484, %v692
    %v694 = vadd.f32 %v691, %v693
    %v695 = vstv %s203
    %v696 = vmul.f32 %v516, %v695
    %v697 = vadd.f32 %v694, %v696
    %v698 = vstv %s204
    %v699 = vmul.f32 %v548, %v698
    %v700 = vadd.f32 %v697, %v699
    %v701 = vstv %s205
    %v702 = vmul.f32 %v580, %v701
    %v703 = vadd.f32 %v700, %v702
    %v704 = vstv %s206
    %v705 = vmul.f32 %v612, %v704
    %v706 = vadd.f32 %v703, %v705
    %v707 = vstv %s209
    %v708 = vadd.f32 %v706, %v707
    %s709 = scalar_lea.vmem [#allocation7], 2
    %710 = vst [vmem:[%s709] sm:$0x1] %v708
    // Predicated region
    $region18: #{spiral_forward_planes.1} parent=1 // pred_check
      _
    $region19: #{spiral_forward_planes.1} parent=1 // pred_check_branch
      %712 = sbr.rel (0) target = $region21
    $region20: #{spiral_forward_planes.1} parent=1 // pred_region
      %s714 = ssub.s32 48, 48
      %715 = vsyncadd [#allocation4], %s714
      %s716 = sshll.u32 [#allocation7], 4
      %s717 = int_to_ptr.vmem [resolvable:$true] %s716
      %722 = dma.vmem_to_hbm [thread:$0]  %s717, 48, %s2, [#allocation4], 16, 16, 1
    $region21: #{spiral_forward_planes.1} parent=1 // pred_fallthru
      _
    // Predicated region
    $region22: #{spiral_forward_planes.1} parent=1 // pred_check
      _
    $region23: #{spiral_forward_planes.1} parent=1 // pred_check_branch
      %724 = sbr.rel (0) target = $region25
    $region24: #{spiral_forward_planes.1} parent=1 // pred_region
      %725 = dma.done [#allocation4], 48
    $region25: #{spiral_forward_planes.1} parent=1 // pred_fallthru
      _
    %726 = vsyncpa [#allocation3], 1
    %727 = vsyncpa [#allocation4], 1
    %728 = vsyncpa [#allocation5], 1

</llo_original>
